<compile_context>
chip_gen: v7x
topology: tpu7x:2x2x1
jax: 0.10.0
libtpu: 0.0.40
codegen_flags: <defaults>
</compile_context>

<pallas_src>
import functools

import jax
import jax.numpy as jnp
from jax.experimental import pallas as pl
from jax.experimental.pallas import tpu as pltpu


# ----------------------------- fused Pallas kernel ------------------------------

def _conv_stem_fused_kernel(p1_ref, w1_ref, b1_ref, w2_ref, b2_ref, w3_ref, b3_ref,
                            o_ref, *, W2):
    """One batch image per grid step.

    p1_ref : (1, 4, M2, K1p) bf16  stage-1 im2col, parity-ordered (p = 2*row_par + col_par)
    w1_ref : (K1p, c1)       bf16  stage-1 weights (BN folded), K zero-padded
    b1_ref : (1, c1)         f32   stage-1 folded bias
    w2_ref : (9, c1, c2)     bf16  stage-2 weights (BN folded), one (c1, c2) slab per tap
    b2_ref : (1, c2)         f32
    w3_ref : (c2, E)         bf16  1x1 projection
    b3_ref : (1, E)          f32
    o_ref  : (1, M2, E)            tokens, row-major over the (H/4, W/4) grid
    """
    M2 = p1_ref.shape[2]
    c1 = w1_ref.shape[1]
    c2 = w2_ref.shape[2]

    # ---- stage 1: four parity-plane GEMMs (+ folded BN bias, ReLU); stays in VMEM ----
    planes = []
    for p in range(4):
        hp = jnp.dot(p1_ref[0, p], w1_ref[...], preferred_element_type=jnp.float32)
        hp = jnp.maximum(hp + b1_ref[...], 0.0)
        planes.append(hp.astype(w2_ref.dtype))            # bf16 operands for the MXU
    h_ee, h_eo, h_oe, h_oo = planes                        # [row parity][col parity]

    # Tokens at the left image edge (j2 == 0): taps with dj == 0 read stage-1 column -1,
    # which is zero padding.  Full-size mask (no broadcast needed inside where).
    left_edge = (jax.lax.broadcasted_iota(jnp.int32, (M2, c1), 0) % W2) == 0

    def tap(h, si, sj):
        # Stage-1 plane value at (i2 + si, j2 + sj) for every token r = i2*W2 + j2,
        # zeros outside the image.  si, sj in {-1, 0}  ->  shift rows down by k.
        k = (-si) * W2 + (-sj)
        if k:
            pad = jnp.zeros((k, h.shape[1]), h.dtype)
            h = jnp.concatenate([pad, h[:M2 - k]], axis=0)
        if sj:
            h = jnp.where(left_edge, jnp.zeros_like(h), h)
        return h

    # conv2 taps (di, dj) in row-major order, expressed on the parity planes.
    tap_table = (
        (h_oo, -1, -1), (h_oe, -1, 0), (h_oo, -1, 0),      # di = 0
        (h_eo,  0, -1), (h_ee,  0, 0), (h_eo,  0, 0),      # di = 1
        (h_oo,  0, -1), (h_oe,  0, 0), (h_oo,  0, 0),      # di = 2
    )

    # ---- stage 2: accumulate the 9 taps' GEMMs (im2col formed in VMEM), BN folded, ReLU ----
    acc = jnp.zeros((M2, c2), jnp.float32)
    for t, (h, si, sj) in enumerate(tap_table):
        acc = acc + jnp.dot(tap(h, si, sj), w2_ref[t], preferred_element_type=jnp.float32)
    h2 = jnp.maximum(acc + b2_ref[...], 0.0).astype(w3_ref.dtype)

    # ---- stage 3: 1x1 conv == GEMM + bias; lane-dense (E-wide) store ----
    out = jnp.dot(h2, w3_ref[...], preferred_element_type=jnp.float32) + b3_ref[...]
    o_ref[0] = out.astype(o_ref.dtype)


# ------------------------------ JAX glue -----------------------------------------

def _round_up(n, m):
    return ((n + m - 1) // m) * m


def _fold_bn(w_hwio, gamma, beta, mean, var, eps):
    # Inference-mode BN (running stats) folded exactly into conv weight/bias, in f32.
    scale = gamma * jax.lax.rsqrt(var + eps)               # (Cout,)
    return w_hwio * scale, beta - mean * scale


def _parity_im2col(x_pad, H2, W2):
    """Stage-1 im2col of the spatially padded NHWC input, grouped by the parity
    (row%2, col%2) of the stage-1 output position.
    Returns (B, 4, H2*W2, 9*C); feature order (kh, kw, cin); tokens row-major."""
    B = x_pad.shape[0]
    C = x_pad.shape[-1]
    planes = []
    for pi in range(2):
        for pj in range(2):
            taps = []
            for di in range(3):
                for dj in range(3):
                    t = x_pad[:, 2 * pi + di::4, 2 * pj + dj::4, :][:, :H2, :W2, :]
                    taps.append(t)
            plane = jnp.concatenate(taps, axis=-1)          # (B, H2, W2, 9*C)
            planes.append(plane.reshape(B, H2 * W2, 9 * C))
    return jnp.stack(planes, axis=1)                        # (B, 4, M2, 9*C)


def init_params(key, embed_dim=32):
    assert embed_dim % 8 == 0
    c1, c2 = embed_dim // 8, embed_dim // 4
    ks = jax.random.split(key, 12)
    p = {
        # conv weights stored as HWIO (deterministic synthetic init, no checkpoint load)
        "w1": 0.1 * jax.random.normal(ks[0], (3, 3, 3, c1), jnp.float32),
        "g1": 1.0 + 0.1 * jax.random.normal(ks[1], (c1,), jnp.float32),
        "b1": 0.1 * jax.random.normal(ks[2], (c1,), jnp.float32),
        "m1": 0.1 * jax.random.normal(ks[3], (c1,), jnp.float32),
        "v1": jax.random.uniform(ks[4], (c1,), jnp.float32, 0.5, 1.5),
        "w2": 0.1 * jax.random.normal(ks[5], (3, 3, c1, c2), jnp.float32),
        "g2": 1.0 + 0.1 * jax.random.normal(ks[6], (c2,), jnp.float32),
        "b2": 0.1 * jax.random.normal(ks[7], (c2,), jnp.float32),
        "m2": 0.1 * jax.random.normal(ks[8], (c2,), jnp.float32),
        "v2": jax.random.uniform(ks[9], (c2,), jnp.float32, 0.5, 1.5),
        "w3": 0.1 * jax.random.normal(ks[10], (c2, embed_dim), jnp.float32),
        "b3": 0.1 * jax.random.normal(ks[11], (embed_dim,), jnp.float32),
    }
    return p


def conv_stem_forward(x_nchw, params, *, img_size=16, eps=1e-5, flatten=True,
                      compute_dtype=jnp.bfloat16, out_dtype=jnp.bfloat16):
    B, C, H, W = x_nchw.shape
    assert H == img_size and W == img_size, "Input image size doesn't match model."
    assert C == 3 and H % 4 == 0 and W % 4 == 0
    H2, W2 = H // 4, W // 4
    M2 = H2 * W2

    # Fold BatchNorm (inference mode) into the conv weights/bias, in f32 (exact).
    w1f, b1f = _fold_bn(params["w1"], params["g1"], params["b1"], params["m1"], params["v1"], eps)
    w2f, b2f = _fold_bn(params["w2"], params["g2"], params["b2"], params["m2"], params["v2"], eps)
    c1, c2, E = w1f.shape[-1], w2f.shape[-1], params["w3"].shape[-1]

    # Stage-1 im2col on the raw 3-channel input, cast ONCE to bf16 so the (small) materialized
    # tensor is narrow.  Everything downstream of it stays in VMEM inside the fused kernel.
    # TODO(synk): this (B, 4, M2, 32) gather could also be formed in-kernel from halo'd input
    #             row strips via manual DMA if it ever shows up in profiles.
    x = jnp.transpose(x_nchw, (0, 2, 3, 1)).astype(compute_dtype)   # NHWC
    x_pad = jnp.pad(x, ((0, 0), (1, 1), (1, 1), (0, 0)))
    patches1 = _parity_im2col(x_pad, H2, W2)                        # (B, 4, M2, 27)

    K1 = patches1.shape[-1]
    K1p = _round_up(K1, 16)                                          # bf16 sublane packing
    if K1p != K1:
        patches1 = jnp.pad(patches1, ((0, 0), (0, 0), (0, 0), (0, K1p - K1)))

    w1m = jnp.pad(w1f.reshape(K1, c1), ((0, K1p - K1), (0, 0))).astype(compute_dtype)
    b1m = b1f.reshape(1, c1).astype(jnp.float32)
    w2m = w2f.reshape(9, c1, c2).astype(compute_dtype)
    b2m = b2f.reshape(1, c2).astype(jnp.float32)
    w3m = params["w3"].astype(compute_dtype)                         # (c2, E)
    b3m = params["b3"].reshape(1, E).astype(jnp.float32)

    # VMEM budget: double-buffered pipelined blocks + weights + f32 live intermediates.
    out_bytes = jnp.dtype(out_dtype).itemsize
    est = (2 * (4 * M2 * K1p * 2)                    # input block x2
           + 2 * (M2 * E * out_bytes)                # output block x2
           + 2 * (2 * (K1p * c1 + 9 * c1 * c2 + c2 * E) + 4 * (c1 + c2 + E))   # weights/biases
           + 4 * M2 * c1 * 2 + 2 * M2 * c1 * 2       # parity planes + tap copies (bf16)
           + M2 * c2 * 4 + M2 * E * 4)               # f32 accumulators
    vmem_limit = int(min(64 * 2 ** 20, max(32 * 2 ** 20, 2 * est)))

    out = pl.pallas_call(
        functools.partial(_conv_stem_fused_kernel, W2=W2),
        out_shape=jax.ShapeDtypeStruct((B, M2, E), out_dtype),
        grid_spec=pltpu.PrefetchScalarGridSpec(
            num_scalar_prefetch=0,
            grid=(B,),
            in_specs=[
                pl.BlockSpec((1, 4, M2, K1p), lambda b: (b, 0, 0, 0)),
                pl.BlockSpec(w1m.shape, lambda b: (0, 0)),
                pl.BlockSpec(b1m.shape, lambda b: (0, 0)),
                pl.BlockSpec(w2m.shape, lambda b: (0, 0, 0)),
                pl.BlockSpec(b2m.shape, lambda b: (0, 0)),
                pl.BlockSpec(w3m.shape, lambda b: (0, 0)),
                pl.BlockSpec(b3m.shape, lambda b: (0, 0)),
            ],
            out_specs=pl.BlockSpec((1, M2, E), lambda b: (b, 0, 0)),
        ),
        compiler_params=pltpu.CompilerParams(
            dimension_semantics=("parallel",),        # one image per step; megacore-shardable
            vmem_limit_bytes=vmem_limit,
        ),
    )(patches1, w1m, b1m, w2m, b2m, w3m, b3m)

    if flatten:
        # == PyTorch x.flatten(2).transpose(1, 2): row-major (h, w) tokens, channel last (BNC).
        return out
    return jnp.transpose(out.reshape(B, H2, W2, E), (0, 3, 1, 2))    # BCHW
    # norm_layer=None -> nn.Identity(), so no trailing norm.


# --------------------------- pure-JAX f32 reference ------------------------------

def _reference_forward(x_nchw, params, *, eps=1e-5):
    w1f, b1f = _fold_bn(params["w1"], params["g1"], params["b1"], params["m1"], params["v1"], eps)
    w2f, b2f = _fold_bn(params["w2"], params["g2"], params["b2"], params["m2"], params["v2"], eps)
    dn = ("NHWC", "HWIO", "NHWC")
    x = jnp.transpose(x_nchw, (0, 2, 3, 1)).astype(jnp.float32)
    y = jax.lax.conv_general_dilated(x, w1f, (2, 2), ((1, 1), (1, 1)), dimension_numbers=dn)
    y = jax.nn.relu(y + b1f)
    y = jax.lax.conv_general_dilated(y, w2f, (2, 2), ((1, 1), (1, 1)), dimension_numbers=dn)
    y = jax.nn.relu(y + b2f)
    z = jnp.einsum("bhwc,ce->bhwe", y, params["w3"]) + params["b3"]
    B, Ho, Wo, E = z.shape
    return z.reshape(B, Ho * Wo, E)


# ------------------------------- demo ---------------------------------------------

if __name__ == "__main__":
    key = jax.random.PRNGKey(0)
    kx, kp = jax.random.split(key)

    B, C, H, W = 2, 3, 16, 16     # small img_size consistent with patch_size=4
    embed_dim = 32                # embed_dim % 8 == 0

    x = jax.random.normal(kx, (B, C, H, W), jnp.float32)   # PyTorch NCHW convention
    params = init_params(kp, embed_dim)

    fwd = jax.jit(functools.partial(conv_stem_forward, img_size=H))
    out = jax.block_until_ready(fwd(x, params))

    num_patches = (H // 4) * (W // 4)
    assert out.shape == (B, num_patches, embed_dim), out.shape
    assert out.dtype == jnp.bfloat16
    assert bool(jnp.all(jnp.isfinite(out)))

    # Numerical check vs a pure-JAX f32 reference of the same ConvStem forward
    # (bf16 GEMM operands with f32 accumulation -> small rounding differences only).
    ref = _reference_forward(x, params)
    max_err = float(jnp.max(jnp.abs(out.astype(jnp.float32) - ref)))
    assert max_err < 5e-2, f"max abs error vs f32 reference: {max_err}"

    print("KERNEL_OK")
</pallas_src>

<mosaic_0001>
module attributes {stable_mosaic.version = 11 : i64} {
  func.func @_conv_stem_fused_kernel(%arg0: i32, %arg1: memref<1x4x16x32xbf16, #tpu.memory_space<vmem>>, %arg2: memref<32x4xbf16, #tpu.memory_space<vmem>>, %arg3: memref<1x4xf32, #tpu.memory_space<vmem>>, %arg4: memref<9x4x8xbf16, #tpu.memory_space<vmem>>, %arg5: memref<1x8xf32, #tpu.memory_space<vmem>>, %arg6: memref<8x32xbf16, #tpu.memory_space<vmem>>, %arg7: memref<1x32xf32, #tpu.memory_space<vmem>>, %arg8: memref<1x16x32xbf16, #tpu.memory_space<vmem>>) attributes {dimension_semantics = [#tpu.dimension_semantics<parallel>], iteration_bounds = array<i64: 2>, scalar_prefetch = 0 : i64, scratch_operands = 0 : i64, tpu.core_type = #tpu.core_type<tc>, window_params = [{transform_indices = @transform_0, window_bounds = array<i64: 1, 4, 16, 32>}, {pipeline_mode = #tpu.pipeline_mode<synchronous>, transform_indices = @transform_1, window_bounds = array<i64: 32, 4>}, {pipeline_mode = #tpu.pipeline_mode<synchronous>, transform_indices = @transform_2, window_bounds = array<i64: 1, 4>}, {pipeline_mode = #tpu.pipeline_mode<synchronous>, transform_indices = @transform_3, window_bounds = array<i64: 9, 4, 8>}, {pipeline_mode = #tpu.pipeline_mode<synchronous>, transform_indices = @transform_4, window_bounds = array<i64: 1, 8>}, {pipeline_mode = #tpu.pipeline_mode<synchronous>, transform_indices = @transform_5, window_bounds = array<i64: 8, 32>}, {pipeline_mode = #tpu.pipeline_mode<synchronous>, transform_indices = @transform_6, window_bounds = array<i64: 1, 32>}, {transform_indices = @transform_7, window_bounds = array<i64: 1, 16, 32>}]} {
    %c0 = arith.constant 0 : index
    %c0_0 = arith.constant 0 : index
    %c0_1 = arith.constant 0 : index
    %c0_2 = arith.constant 0 : index
    %0 = vector.load %arg1[%c0, %c0_0, %c0_1, %c0_2] : memref<1x4x16x32xbf16, #tpu.memory_space<vmem>>, vector<1x1x16x32xbf16>
    %1 = vector.shape_cast %0 : vector<1x1x16x32xbf16> to vector<16x32xbf16>
    %c0_3 = arith.constant 0 : index
    %c0_4 = arith.constant 0 : index
    %2 = vector.load %arg2[%c0_3, %c0_4] : memref<32x4xbf16, #tpu.memory_space<vmem>>, vector<32x4xbf16>
    %cst = arith.constant dense<0.000000e+00> : vector<16x4xf32>
    %3 = tpu.matmul %1, %2, %cst {dimension_numbers = #tpu.dot_dimension_numbers<[1], [0], [0], [1], [0, 0, 1, 1], [], []>} : vector<16x32xbf16>, vector<32x4xbf16>, vector<16x4xf32> -> vector<16x4xf32>
    %c0_5 = arith.constant 0 : index
    %c0_6 = arith.constant 0 : index
    %4 = vector.load %arg3[%c0_5, %c0_6] : memref<1x4xf32, #tpu.memory_space<vmem>>, vector<1x4xf32>
    %5 = vector.broadcast %4 : vector<1x4xf32> to vector<16x4xf32>
    %6 = arith.addf %3, %5 : vector<16x4xf32>
    %cst_7 = arith.constant 0.000000e+00 : f32
    %7 = vector.broadcast %cst_7 : f32 to vector<16x4xf32>
    %8 = arith.maximumf %6, %7 : vector<16x4xf32>
    %9 = arith.truncf %8 : vector<16x4xf32> to vector<16x4xbf16>
    %c0_8 = arith.constant 0 : index
    %c1 = arith.constant 1 : index
    %c0_9 = arith.constant 0 : index
    %c0_10 = arith.constant 0 : index
    %10 = vector.load %arg1[%c0_8, %c1, %c0_9, %c0_10] : memref<1x4x16x32xbf16, #tpu.memory_space<vmem>>, vector<1x1x16x32xbf16>
    %11 = vector.shape_cast %10 : vector<1x1x16x32xbf16> to vector<16x32xbf16>
    %c0_11 = arith.constant 0 : index
    %c0_12 = arith.constant 0 : index
    %12 = vector.load %arg2[%c0_11, %c0_12] : memref<32x4xbf16, #tpu.memory_space<vmem>>, vector<32x4xbf16>
    %cst_13 = arith.constant dense<0.000000e+00> : vector<16x4xf32>
    %13 = tpu.matmul %11, %12, %cst_13 {dimension_numbers = #tpu.dot_dimension_numbers<[1], [0], [0], [1], [0, 0, 1, 1], [], []>} : vector<16x32xbf16>, vector<32x4xbf16>, vector<16x4xf32> -> vector<16x4xf32>
    %c0_14 = arith.constant 0 : index
    %c0_15 = arith.constant 0 : index
    %14 = vector.load %arg3[%c0_14, %c0_15] : memref<1x4xf32, #tpu.memory_space<vmem>>, vector<1x4xf32>
    %15 = vector.broadcast %14 : vector<1x4xf32> to vector<16x4xf32>
    %16 = arith.addf %13, %15 : vector<16x4xf32>
    %cst_16 = arith.constant 0.000000e+00 : f32
    %17 = vector.broadcast %cst_16 : f32 to vector<16x4xf32>
    %18 = arith.maximumf %16, %17 : vector<16x4xf32>
    %19 = arith.truncf %18 : vector<16x4xf32> to vector<16x4xbf16>
    %c0_17 = arith.constant 0 : index
    %c2 = arith.constant 2 : index
    %c0_18 = arith.constant 0 : index
    %c0_19 = arith.constant 0 : index
    %20 = vector.load %arg1[%c0_17, %c2, %c0_18, %c0_19] : memref<1x4x16x32xbf16, #tpu.memory_space<vmem>>, vector<1x1x16x32xbf16>
    %21 = vector.shape_cast %20 : vector<1x1x16x32xbf16> to vector<16x32xbf16>
    %c0_20 = arith.constant 0 : index
    %c0_21 = arith.constant 0 : index
    %22 = vector.load %arg2[%c0_20, %c0_21] : memref<32x4xbf16, #tpu.memory_space<vmem>>, vector<32x4xbf16>
    %cst_22 = arith.constant dense<0.000000e+00> : vector<16x4xf32>
    %23 = tpu.matmul %21, %22, %cst_22 {dimension_numbers = #tpu.dot_dimension_numbers<[1], [0], [0], [1], [0, 0, 1, 1], [], []>} : vector<16x32xbf16>, vector<32x4xbf16>, vector<16x4xf32> -> vector<16x4xf32>
    %c0_23 = arith.constant 0 : index
    %c0_24 = arith.constant 0 : index
    %24 = vector.load %arg3[%c0_23, %c0_24] : memref<1x4xf32, #tpu.memory_space<vmem>>, vector<1x4xf32>
    %25 = vector.broadcast %24 : vector<1x4xf32> to vector<16x4xf32>
    %26 = arith.addf %23, %25 : vector<16x4xf32>
    %cst_25 = arith.constant 0.000000e+00 : f32
    %27 = vector.broadcast %cst_25 : f32 to vector<16x4xf32>
    %28 = arith.maximumf %26, %27 : vector<16x4xf32>
    %29 = arith.truncf %28 : vector<16x4xf32> to vector<16x4xbf16>
    %c0_26 = arith.constant 0 : index
    %c3 = arith.constant 3 : index
    %c0_27 = arith.constant 0 : index
    %c0_28 = arith.constant 0 : index
    %30 = vector.load %arg1[%c0_26, %c3, %c0_27, %c0_28] : memref<1x4x16x32xbf16, #tpu.memory_space<vmem>>, vector<1x1x16x32xbf16>
    %31 = vector.shape_cast %30 : vector<1x1x16x32xbf16> to vector<16x32xbf16>
    %c0_29 = arith.constant 0 : index
    %c0_30 = arith.constant 0 : index
    %32 = vector.load %arg2[%c0_29, %c0_30] : memref<32x4xbf16, #tpu.memory_space<vmem>>, vector<32x4xbf16>
    %cst_31 = arith.constant dense<0.000000e+00> : vector<16x4xf32>
    %33 = tpu.matmul %31, %32, %cst_31 {dimension_numbers = #tpu.dot_dimension_numbers<[1], [0], [0], [1], [0, 0, 1, 1], [], []>} : vector<16x32xbf16>, vector<32x4xbf16>, vector<16x4xf32> -> vector<16x4xf32>
    %c0_32 = arith.constant 0 : index
    %c0_33 = arith.constant 0 : index
    %34 = vector.load %arg3[%c0_32, %c0_33] : memref<1x4xf32, #tpu.memory_space<vmem>>, vector<1x4xf32>
    %35 = vector.broadcast %34 : vector<1x4xf32> to vector<16x4xf32>
    %36 = arith.addf %33, %35 : vector<16x4xf32>
    %cst_34 = arith.constant 0.000000e+00 : f32
    %37 = vector.broadcast %cst_34 : f32 to vector<16x4xf32>
    %38 = arith.maximumf %36, %37 : vector<16x4xf32>
    %39 = arith.truncf %38 : vector<16x4xf32> to vector<16x4xbf16>
    %40 = tpu.iota {dimensions = array<i32: 0>} : vector<16x4xi32>
    %c4_i32 = arith.constant 4 : i32
    %c0_i32 = arith.constant 0 : i32
    %41 = arith.cmpi eq, %c4_i32, %c0_i32 : i32
    %c1_i32 = arith.constant 1 : i32
    %42 = arith.select %41, %c1_i32, %c4_i32 : i32
    %43 = vector.broadcast %42 : i32 to vector<16x4xi32>
    %44 = arith.remsi %40, %43 : vector<16x4xi32>
    %c0_i32_35 = arith.constant 0 : i32
    %45 = vector.broadcast %c0_i32_35 : i32 to vector<16x4xi32>
    %46 = arith.cmpi ne, %44, %45 : vector<16x4xi32>
    %c0_i32_36 = arith.constant 0 : i32
    %47 = vector.broadcast %c0_i32_36 : i32 to vector<16x4xi32>
    %48 = arith.cmpi slt, %44, %47 : vector<16x4xi32>
    %c0_i32_37 = arith.constant 0 : i32
    %49 = arith.cmpi slt, %42, %c0_i32_37 : i32
    %50 = vector.broadcast %49 : i1 to vector<16x4xi1>
    %51 = vector.broadcast %50 : vector<16x4xi1> to vector<16x4xi1>
    %52 = arith.xori %48, %51 : vector<16x4xi1>
    %53 = arith.andi %52, %46 : vector<16x4xi1>
    %54 = vector.broadcast %42 : i32 to vector<16x4xi32>
    %55 = arith.addi %44, %54 : vector<16x4xi32>
    %56 = arith.select %53, %55, %44 : vector<16x4xi1>, vector<16x4xi32>
    %c0_i32_38 = arith.constant 0 : i32
    %57 = vector.broadcast %c0_i32_38 : i32 to vector<16x4xi32>
    %58 = arith.cmpi eq, %56, %57 : vector<16x4xi32>
    %cst_39 = arith.constant 0.000000e+00 : f32
    %59 = vector.broadcast %cst_39 : f32 to vector<16x8xf32>
    %cst_40 = arith.constant 0.000000e+00 : bf16
    %60 = vector.broadcast %cst_40 : bf16 to vector<5x4xbf16>
    %61 = vector.extract_strided_slice %39 {offsets = [0, 0], sizes = [11, 4], strides = [1, 1]} : vector<16x4xbf16> to vector<11x4xbf16>
    %62 = tpu.concatenate %60, %61 in 0 : vector<5x4xbf16>, vector<11x4xbf16> -> vector<16x4xbf16>
    %cst_41 = arith.constant 0.000000e+00 : bf16
    %63 = vector.broadcast %cst_41 : bf16 to vector<16x4xbf16>
    %64 = arith.select %58, %63, %62 : vector<16x4xi1>, vector<16x4xbf16>
    %c0_42 = arith.constant 0 : index
    %c0_43 = arith.constant 0 : index
    %c0_44 = arith.constant 0 : index
    %65 = vector.load %arg4[%c0_42, %c0_43, %c0_44] : memref<9x4x8xbf16, #tpu.memory_space<vmem>>, vector<1x4x8xbf16>
    %66 = vector.shape_cast %65 : vector<1x4x8xbf16> to vector<4x8xbf16>
    %cst_45 = arith.constant dense<0.000000e+00> : vector<16x8xf32>
    %67 = tpu.matmul %64, %66, %cst_45 {dimension_numbers = #tpu.dot_dimension_numbers<[1], [0], [0], [1], [0, 0, 1, 1], [], []>} : vector<16x4xbf16>, vector<4x8xbf16>, vector<16x8xf32> -> vector<16x8xf32>
    %68 = arith.addf %59, %67 : vector<16x8xf32>
    %cst_46 = arith.constant 0.000000e+00 : bf16
    %69 = vector.broadcast %cst_46 : bf16 to vector<4x4xbf16>
    %70 = vector.extract_strided_slice %29 {offsets = [0, 0], sizes = [12, 4], strides = [1, 1]} : vector<16x4xbf16> to vector<12x4xbf16>
    %71 = tpu.concatenate %69, %70 in 0 : vector<4x4xbf16>, vector<12x4xbf16> -> vector<16x4xbf16>
    %c1_47 = arith.constant 1 : index
    %c0_48 = arith.constant 0 : index
    %c0_49 = arith.constant 0 : index
    %72 = vector.load %arg4[%c1_47, %c0_48, %c0_49] : memref<9x4x8xbf16, #tpu.memory_space<vmem>>, vector<1x4x8xbf16>
    %73 = vector.shape_cast %72 : vector<1x4x8xbf16> to vector<4x8xbf16>
    %cst_50 = arith.constant dense<0.000000e+00> : vector<16x8xf32>
    %74 = tpu.matmul %71, %73, %cst_50 {dimension_numbers = #tpu.dot_dimension_numbers<[1], [0], [0], [1], [0, 0, 1, 1], [], []>} : vector<16x4xbf16>, vector<4x8xbf16>, vector<16x8xf32> -> vector<16x8xf32>
    %75 = arith.addf %68, %74 : vector<16x8xf32>
    %cst_51 = arith.constant 0.000000e+00 : bf16
    %76 = vector.broadcast %cst_51 : bf16 to vector<4x4xbf16>
    %77 = vector.extract_strided_slice %39 {offsets = [0, 0], sizes = [12, 4], strides = [1, 1]} : vector<16x4xbf16> to vector<12x4xbf16>
    %78 = tpu.concatenate %76, %77 in 0 : vector<4x4xbf16>, vector<12x4xbf16> -> vector<16x4xbf16>
    %c2_52 = arith.constant 2 : index
    %c0_53 = arith.constant 0 : index
    %c0_54 = arith.constant 0 : index
    %79 = vector.load %arg4[%c2_52, %c0_53, %c0_54] : memref<9x4x8xbf16, #tpu.memory_space<vmem>>, vector<1x4x8xbf16>
    %80 = vector.shape_cast %79 : vector<1x4x8xbf16> to vector<4x8xbf16>
    %cst_55 = arith.constant dense<0.000000e+00> : vector<16x8xf32>
    %81 = tpu.matmul %78, %80, %cst_55 {dimension_numbers = #tpu.dot_dimension_numbers<[1], [0], [0], [1], [0, 0, 1, 1], [], []>} : vector<16x4xbf16>, vector<4x8xbf16>, vector<16x8xf32> -> vector<16x8xf32>
    %82 = arith.addf %75, %81 : vector<16x8xf32>
    %cst_56 = arith.constant 0.000000e+00 : bf16
    %83 = vector.broadcast %cst_56 : bf16 to vector<1x4xbf16>
    %84 = vector.extract_strided_slice %19 {offsets = [0, 0], sizes = [15, 4], strides = [1, 1]} : vector<16x4xbf16> to vector<15x4xbf16>
    %85 = tpu.concatenate %83, %84 in 0 : vector<1x4xbf16>, vector<15x4xbf16> -> vector<16x4xbf16>
    %cst_57 = arith.constant 0.000000e+00 : bf16
    %86 = vector.broadcast %cst_57 : bf16 to vector<16x4xbf16>
    %87 = arith.select %58, %86, %85 : vector<16x4xi1>, vector<16x4xbf16>
    %c3_58 = arith.constant 3 : index
    %c0_59 = arith.constant 0 : index
    %c0_60 = arith.constant 0 : index
    %88 = vector.load %arg4[%c3_58, %c0_59, %c0_60] : memref<9x4x8xbf16, #tpu.memory_space<vmem>>, vector<1x4x8xbf16>
    %89 = vector.shape_cast %88 : vector<1x4x8xbf16> to vector<4x8xbf16>
    %cst_61 = arith.constant dense<0.000000e+00> : vector<16x8xf32>
    %90 = tpu.matmul %87, %89, %cst_61 {dimension_numbers = #tpu.dot_dimension_numbers<[1], [0], [0], [1], [0, 0, 1, 1], [], []>} : vector<16x4xbf16>, vector<4x8xbf16>, vector<16x8xf32> -> vector<16x8xf32>
    %91 = arith.addf %82, %90 : vector<16x8xf32>
    %c4 = arith.constant 4 : index
    %c0_62 = arith.constant 0 : index
    %c0_63 = arith.constant 0 : index
    %92 = vector.load %arg4[%c4, %c0_62, %c0_63] : memref<9x4x8xbf16, #tpu.memory_space<vmem>>, vector<1x4x8xbf16>
    %93 = vector.shape_cast %92 : vector<1x4x8xbf16> to vector<4x8xbf16>
    %cst_64 = arith.constant dense<0.000000e+00> : vector<16x8xf32>
    %94 = tpu.matmul %9, %93, %cst_64 {dimension_numbers = #tpu.dot_dimension_numbers<[1], [0], [0], [1], [0, 0, 1, 1], [], []>} : vector<16x4xbf16>, vector<4x8xbf16>, vector<16x8xf32> -> vector<16x8xf32>
    %95 = arith.addf %91, %94 : vector<16x8xf32>
    %c5 = arith.constant 5 : index
    %c0_65 = arith.constant 0 : index
    %c0_66 = arith.constant 0 : index
    %96 = vector.load %arg4[%c5, %c0_65, %c0_66] : memref<9x4x8xbf16, #tpu.memory_space<vmem>>, vector<1x4x8xbf16>
    %97 = vector.shape_cast %96 : vector<1x4x8xbf16> to vector<4x8xbf16>
    %cst_67 = arith.constant dense<0.000000e+00> : vector<16x8xf32>
    %98 = tpu.matmul %19, %97, %cst_67 {dimension_numbers = #tpu.dot_dimension_numbers<[1], [0], [0], [1], [0, 0, 1, 1], [], []>} : vector<16x4xbf16>, vector<4x8xbf16>, vector<16x8xf32> -> vector<16x8xf32>
    %99 = arith.addf %95, %98 : vector<16x8xf32>
    %cst_68 = arith.constant 0.000000e+00 : bf16
    %100 = vector.broadcast %cst_68 : bf16 to vector<1x4xbf16>
    %101 = vector.extract_strided_slice %39 {offsets = [0, 0], sizes = [15, 4], strides = [1, 1]} : vector<16x4xbf16> to vector<15x4xbf16>
    %102 = tpu.concatenate %100, %101 in 0 : vector<1x4xbf16>, vector<15x4xbf16> -> vector<16x4xbf16>
    %cst_69 = arith.constant 0.000000e+00 : bf16
    %103 = vector.broadcast %cst_69 : bf16 to vector<16x4xbf16>
    %104 = arith.select %58, %103, %102 : vector<16x4xi1>, vector<16x4xbf16>
    %c6 = arith.constant 6 : index
    %c0_70 = arith.constant 0 : index
    %c0_71 = arith.constant 0 : index
    %105 = vector.load %arg4[%c6, %c0_70, %c0_71] : memref<9x4x8xbf16, #tpu.memory_space<vmem>>, vector<1x4x8xbf16>
    %106 = vector.shape_cast %105 : vector<1x4x8xbf16> to vector<4x8xbf16>
    %cst_72 = arith.constant dense<0.000000e+00> : vector<16x8xf32>
    %107 = tpu.matmul %104, %106, %cst_72 {dimension_numbers = #tpu.dot_dimension_numbers<[1], [0], [0], [1], [0, 0, 1, 1], [], []>} : vector<16x4xbf16>, vector<4x8xbf16>, vector<16x8xf32> -> vector<16x8xf32>
    %108 = arith.addf %99, %107 : vector<16x8xf32>
    %c7 = arith.constant 7 : index
    %c0_73 = arith.constant 0 : index
    %c0_74 = arith.constant 0 : index
    %109 = vector.load %arg4[%c7, %c0_73, %c0_74] : memref<9x4x8xbf16, #tpu.memory_space<vmem>>, vector<1x4x8xbf16>
    %110 = vector.shape_cast %109 : vector<1x4x8xbf16> to vector<4x8xbf16>
    %cst_75 = arith.constant dense<0.000000e+00> : vector<16x8xf32>
    %111 = tpu.matmul %29, %110, %cst_75 {dimension_numbers = #tpu.dot_dimension_numbers<[1], [0], [0], [1], [0, 0, 1, 1], [], []>} : vector<16x4xbf16>, vector<4x8xbf16>, vector<16x8xf32> -> vector<16x8xf32>
    %112 = arith.addf %108, %111 : vector<16x8xf32>
    %c8 = arith.constant 8 : index
    %c0_76 = arith.constant 0 : index
    %c0_77 = arith.constant 0 : index
    %113 = vector.load %arg4[%c8, %c0_76, %c0_77] : memref<9x4x8xbf16, #tpu.memory_space<vmem>>, vector<1x4x8xbf16>
    %114 = vector.shape_cast %113 : vector<1x4x8xbf16> to vector<4x8xbf16>
    %cst_78 = arith.constant dense<0.000000e+00> : vector<16x8xf32>
    %115 = tpu.matmul %39, %114, %cst_78 {dimension_numbers = #tpu.dot_dimension_numbers<[1], [0], [0], [1], [0, 0, 1, 1], [], []>} : vector<16x4xbf16>, vector<4x8xbf16>, vector<16x8xf32> -> vector<16x8xf32>
    %116 = arith.addf %112, %115 : vector<16x8xf32>
    %c0_79 = arith.constant 0 : index
    %c0_80 = arith.constant 0 : index
    %117 = vector.load %arg5[%c0_79, %c0_80] : memref<1x8xf32, #tpu.memory_space<vmem>>, vector<1x8xf32>
    %118 = vector.broadcast %117 : vector<1x8xf32> to vector<16x8xf32>
    %119 = arith.addf %116, %118 : vector<16x8xf32>
    %cst_81 = arith.constant 0.000000e+00 : f32
    %120 = vector.broadcast %cst_81 : f32 to vector<16x8xf32>
    %121 = arith.maximumf %119, %120 : vector<16x8xf32>
    %122 = arith.truncf %121 : vector<16x8xf32> to vector<16x8xbf16>
    %c0_82 = arith.constant 0 : index
    %c0_83 = arith.constant 0 : index
    %123 = vector.load %arg6[%c0_82, %c0_83] : memref<8x32xbf16, #tpu.memory_space<vmem>>, vector<8x32xbf16>
    %cst_84 = arith.constant dense<0.000000e+00> : vector<16x32xf32>
    %124 = tpu.matmul %122, %123, %cst_84 {dimension_numbers = #tpu.dot_dimension_numbers<[1], [0], [0], [1], [0, 0, 1, 1], [], []>} : vector<16x8xbf16>, vector<8x32xbf16>, vector<16x32xf32> -> vector<16x32xf32>
    %c0_85 = arith.constant 0 : index
    %c0_86 = arith.constant 0 : index
    %125 = vector.load %arg7[%c0_85, %c0_86] : memref<1x32xf32, #tpu.memory_space<vmem>>, vector<1x32xf32>
    %126 = vector.broadcast %125 : vector<1x32xf32> to vector<16x32xf32>
    %127 = arith.addf %124, %126 : vector<16x32xf32>
    %128 = arith.truncf %127 : vector<16x32xf32> to vector<16x32xbf16>
    %c0_87 = arith.constant 0 : index
    %c0_88 = arith.constant 0 : index
    %c0_89 = arith.constant 0 : index
    %129 = vector.load %arg8[%c0_87, %c0_88, %c0_89] : memref<1x16x32xbf16, #tpu.memory_space<vmem>>, vector<1x16x32xbf16>
    %130 = vector.shape_cast %129 : vector<1x16x32xbf16> to vector<16x32xbf16>
    %131 = vector.shape_cast %128 : vector<16x32xbf16> to vector<1x16x32xbf16>
    tpu.vector_store %arg8[%c0_87, %c0_88, %c0_89], %131 {strides = array<i32>} : memref<1x16x32xbf16, #tpu.memory_space<vmem>>, vector<1x16x32xbf16>,
    return
  }
  func.func @transform_0(%arg0: i32) -> (i32, i32, i32, i32) {
    %c0_i32 = arith.constant 0 : i32
    %c0_i32_0 = arith.constant 0 : i32
    %c0_i32_1 = arith.constant 0 : i32
    %c0_i32_2 = arith.constant 0 : i32
    return %arg0, %c0_i32, %c0_i32_0, %c0_i32_1 : i32, i32, i32, i32
  }
  func.func @transform_1(%arg0: i32) -> (i32, i32) {
    %c0_i32 = arith.constant 0 : i32
    %c0_i32_0 = arith.constant 0 : i32
    %c0_i32_1 = arith.constant 0 : i32
    return %c0_i32, %c0_i32_0 : i32, i32
  }
  func.func @transform_2(%arg0: i32) -> (i32, i32) {
    %c0_i32 = arith.constant 0 : i32
    %c0_i32_0 = arith.constant 0 : i32
    %c0_i32_1 = arith.constant 0 : i32
    return %c0_i32, %c0_i32_0 : i32, i32
  }
  func.func @transform_3(%arg0: i32) -> (i32, i32, i32) {
    %c0_i32 = arith.constant 0 : i32
    %c0_i32_0 = arith.constant 0 : i32
    %c0_i32_1 = arith.constant 0 : i32
    %c0_i32_2 = arith.constant 0 : i32
    return %c0_i32, %c0_i32_0, %c0_i32_1 : i32, i32, i32
  }
  func.func @transform_4(%arg0: i32) -> (i32, i32) {
    %c0_i32 = arith.constant 0 : i32
    %c0_i32_0 = arith.constant 0 : i32
    %c0_i32_1 = arith.constant 0 : i32
    return %c0_i32, %c0_i32_0 : i32, i32
  }
  func.func @transform_5(%arg0: i32) -> (i32, i32) {
    %c0_i32 = arith.constant 0 : i32
    %c0_i32_0 = arith.constant 0 : i32
    %c0_i32_1 = arith.constant 0 : i32
    return %c0_i32, %c0_i32_0 : i32, i32
  }
  func.func @transform_6(%arg0: i32) -> (i32, i32) {
    %c0_i32 = arith.constant 0 : i32
    %c0_i32_0 = arith.constant 0 : i32
    %c0_i32_1 = arith.constant 0 : i32
    return %c0_i32, %c0_i32_0 : i32, i32
  }
  func.func @transform_7(%arg0: i32) -> (i32, i32, i32) {
    %c0_i32 = arith.constant 0 : i32
    %c0_i32_0 = arith.constant 0 : i32
    %c0_i32_1 = arith.constant 0 : i32
    return %arg0, %c0_i32, %c0_i32_0 : i32, i32, i32
  }
}

</mosaic_0001>

<llo_original>
// kernel: conv_stem_forward.1
$region0: #{conv_stem_forward.1}
  #allocation0 [shape = 'u32[]', space=smem, size = 0x4, offset = 0x4, fixed_abs, tag = 'smem constant byte address 0x4 - core index']
  #allocation1 [shape = 'u32[144,128]{1,0:T(1,128)}', space=vmem, size = 0x12000, scoped, tag = 'internal scratch']
  %s0 = inlined_call_operand.vmem [shape: bf16[2,4,16,32], index: 0, kind: input, shape index: {}]
  %s1 = inlined_call_operand.vmem [shape: bf16[32,4], index: 1, kind: input, shape index: {}]
  %s2 = inlined_call_operand.vmem [shape: f32[1,4], index: 2, kind: input, shape index: {}]
  %s3 = inlined_call_operand.vmem [shape: bf16[9,4,8], index: 3, kind: input, shape index: {}]
  %s4 = inlined_call_operand.vmem [shape: f32[1,8], index: 4, kind: input, shape index: {}]
  %s5 = inlined_call_operand.vmem [shape: bf16[8,32], index: 5, kind: input, shape index: {}]
  %s6 = inlined_call_operand.vmem [shape: f32[1,32], index: 6, kind: input, shape index: {}]
  %s7 = inlined_call_operand.hbm [shape: bf16[2,16,32], index: 7, kind: output, shape index: {}]
  %s8 = sld [smem:[#allocation0]]
  $region61: #{conv_stem_forward.1} parent=0
    _
  %s10 = ssub.s32 1, %s8
  %s11 = scalar_select 0, %s10, %s8
  $region1: #{conv_stem_forward.1} parent=0
    #allocation2 [shape = 'u8[8192]{0}', space=vmem, size = 0x2000, scoped, tag = 'output window, operand 0']
    #allocation3 [shape = 's32[2]{0}', space=sflag, size = 0x8, scoped, tag = 'scoped memory for conv_stem_forward.1']
    %12 = vsyncpa [#allocation3], 0
    %s13 = scalar_lea.sflag [#allocation3], 1
    %14 = vsyncpa %s13, 0
    loop: start=0, step=1, limit=4
    $region2: #{conv_stem_forward.1} parent=1 // loop_pre_header
      _
    $region3: #{conv_stem_forward.1} parent=1 // loop_header
      %s16 = sphi 0, %s20
      %p17 = scmp.ge.s32.totalorder %s16, 4
      %s26 = sphi 0, %s28
      %s29 = sphi 0, %s26
      %s30 = sphi 0, %s29
      %s46 = sphi 0, %s30
      %s50 = sphi 0, %s50
      %s52 = sphi 0, %s50
      %s53 = sphi 0, %s52
      %s67 = sphi 0, %s53
      %s71 = sphi 0, %s71
      %s73 = sphi 0, %s71
      %s74 = sphi 0, %s73
      %s88 = sphi 0, %s74
      %s92 = sphi 0, %s92
      %s94 = sphi 0, %s92
      %s95 = sphi 0, %s94
      %s109 = sphi 0, %s95
      %s113 = sphi 0, %s113
      %s115 = sphi 0, %s113
      %s116 = sphi 0, %s115
      %s130 = sphi 0, %s116
      %s134 = sphi 0, %s134
      %s136 = sphi 0, %s134
      %s137 = sphi 0, %s136
      %s151 = sphi 0, %s137
      %s155 = sphi 0, %s155
      %s157 = sphi 0, %s155
      %s158 = sphi 0, %s157
      %s172 = sphi 0, %s158
      %s178 = sphi 0, %s180
      %s181 = sphi 0, %s178
      %s182 = sphi 0, %s181
      %s198 = sphi 0, %s182
    $region4: #{conv_stem_forward.1} parent=1 // loop_header_branch
      %19 = sbr.rel (%p17) target = $region8
    $region5: #{conv_stem_forward.1} parent=1 // loop_body
      %s21 = ssub.s32 %s16, 1
      %s22 = ssub.s32 %s16, 2
      %s23 = sadd.s32 %s16, 1
      %s24 = ssub.s32 %s16, %s23
      %p25 = scmp.eq.s32.totalorder %s24, 0
      %s27 = sadd.s32 %s26, 1
      %s28 = scalar_select %p25, %s26, %s27
      %p31 = pneg %p25
      %p32 = scmp.eq.s32.totalorder %s16, 1
      %p33 = por %p31, %p32
      %p34 = scmp.ne.s32.totalorder %s26, %s29
      %p35 = scmp.eq.s32.totalorder %s16, 0
      %p36 = por %p34, %p35
      %p37 = scmp.ne.s32.totalorder %s26, %s29
      %p38 = scmp.eq.s32.totalorder %s21, 1
      %p39 = por %p37, %p38
      %p40 = scmp.ne.s32.totalorder %s29, %s30
      %p41 = scmp.eq.s32.totalorder %s21, 0
      %p42 = por %p40, %p41
      %p43 = scmp.ne.s32.totalorder %s29, %s30
      %p44 = scmp.eq.s32.totalorder %s22, 1
      %p45 = por %p43, %p44
      %p47 = scmp.ne.s32.totalorder %s30, %s46
      %p48 = scmp.eq.s32.totalorder %s22, 0
      %p49 = por %p47, %p48
      %s51 = sadd.s32 %s50, 1
      %p54 = scmp.eq.s32.totalorder %s16, 1
      %p55 = scmp.ne.s32.totalorder %s50, %s52
      %p56 = scmp.eq.s32.totalorder %s16, 0
      %p57 = por %p55, %p56
      %p58 = scmp.ne.s32.totalorder %s50, %s52
      %p59 = scmp.eq.s32.totalorder %s21, 1
      %p60 = por %p58, %p59
      %p61 = scmp.ne.s32.totalorder %s52, %s53
      %p62 = scmp.eq.s32.totalorder %s21, 0
      %p63 = por %p61, %p62
      %p64 = scmp.ne.s32.totalorder %s52, %s53
      %p65 = scmp.eq.s32.totalorder %s22, 1
      %p66 = por %p64, %p65
      %p68 = scmp.ne.s32.totalorder %s53, %s67
      %p69 = scmp.eq.s32.totalorder %s22, 0
      %p70 = por %p68, %p69
      %s72 = sadd.s32 %s71, 1
      %p75 = scmp.eq.s32.totalorder %s16, 1
      %p76 = scmp.ne.s32.totalorder %s71, %s73
      %p77 = scmp.eq.s32.totalorder %s16, 0
      %p78 = por %p76, %p77
      %p79 = scmp.ne.s32.totalorder %s71, %s73
      %p80 = scmp.eq.s32.totalorder %s21, 1
      %p81 = por %p79, %p80
      %p82 = scmp.ne.s32.totalorder %s73, %s74
      %p83 = scmp.eq.s32.totalorder %s21, 0
      %p84 = por %p82, %p83
      %p85 = scmp.ne.s32.totalorder %s73, %s74
      %p86 = scmp.eq.s32.totalorder %s22, 1
      %p87 = por %p85, %p86
      %p89 = scmp.ne.s32.totalorder %s74, %s88
      %p90 = scmp.eq.s32.totalorder %s22, 0
      %p91 = por %p89, %p90
      %s93 = sadd.s32 %s92, 1
      %p96 = scmp.eq.s32.totalorder %s16, 1
      %p97 = scmp.ne.s32.totalorder %s92, %s94
      %p98 = scmp.eq.s32.totalorder %s16, 0
      %p99 = por %p97, %p98
      %p100 = scmp.ne.s32.totalorder %s92, %s94
      %p101 = scmp.eq.s32.totalorder %s21, 1
      %p102 = por %p100, %p101
      %p103 = scmp.ne.s32.totalorder %s94, %s95
      %p104 = scmp.eq.s32.totalorder %s21, 0
      %p105 = por %p103, %p104
      %p106 = scmp.ne.s32.totalorder %s94, %s95
      %p107 = scmp.eq.s32.totalorder %s22, 1
      %p108 = por %p106, %p107
      %p110 = scmp.ne.s32.totalorder %s95, %s109
      %p111 = scmp.eq.s32.totalorder %s22, 0
      %p112 = por %p110, %p111
      %s114 = sadd.s32 %s113, 1
      %p117 = scmp.eq.s32.totalorder %s16, 1
      %p118 = scmp.ne.s32.totalorder %s113, %s115
      %p119 = scmp.eq.s32.totalorder %s16, 0
      %p120 = por %p118, %p119
      %p121 = scmp.ne.s32.totalorder %s113, %s115
      %p122 = scmp.eq.s32.totalorder %s21, 1
      %p123 = por %p121, %p122
      %p124 = scmp.ne.s32.totalorder %s115, %s116
      %p125 = scmp.eq.s32.totalorder %s21, 0
      %p126 = por %p124, %p125
      %p127 = scmp.ne.s32.totalorder %s115, %s116
      %p128 = scmp.eq.s32.totalorder %s22, 1
      %p129 = por %p127, %p128
      %p131 = scmp.ne.s32.totalorder %s116, %s130
      %p132 = scmp.eq.s32.totalorder %s22, 0
      %p133 = por %p131, %p132
      %s135 = sadd.s32 %s134, 1
      %p138 = scmp.eq.s32.totalorder %s16, 1
      %p139 = scmp.ne.s32.totalorder %s134, %s136
      %p140 = scmp.eq.s32.totalorder %s16, 0
      %p141 = por %p139, %p140
      %p142 = scmp.ne.s32.totalorder %s134, %s136
      %p143 = scmp.eq.s32.totalorder %s21, 1
      %p144 = por %p142, %p143
      %p145 = scmp.ne.s32.totalorder %s136, %s137
      %p146 = scmp.eq.s32.totalorder %s21, 0
      %p147 = por %p145, %p146
      %p148 = scmp.ne.s32.totalorder %s136, %s137
      %p149 = scmp.eq.s32.totalorder %s22, 1
      %p150 = por %p148, %p149
      %p152 = scmp.ne.s32.totalorder %s137, %s151
      %p153 = scmp.eq.s32.totalorder %s22, 0
      %p154 = por %p152, %p153
      %s156 = sadd.s32 %s155, 1
      %p159 = scmp.eq.s32.totalorder %s16, 1
      %p160 = scmp.ne.s32.totalorder %s155, %s157
      %p161 = scmp.eq.s32.totalorder %s16, 0
      %p162 = por %p160, %p161
      %p163 = scmp.ne.s32.totalorder %s155, %s157
      %p164 = scmp.eq.s32.totalorder %s21, 1
      %p165 = por %p163, %p164
      %p166 = scmp.ne.s32.totalorder %s157, %s158
      %p167 = scmp.eq.s32.totalorder %s21, 0
      %p168 = por %p166, %p167
      %p169 = scmp.ne.s32.totalorder %s157, %s158
      %p170 = scmp.eq.s32.totalorder %s22, 1
      %p171 = por %p169, %p170
      %p173 = scmp.ne.s32.totalorder %s158, %s172
      %p174 = scmp.eq.s32.totalorder %s22, 0
      %p175 = por %p173, %p174
      %s176 = ssub.s32 %s16, %s23
      %p177 = scmp.eq.s32.totalorder %s176, 0
      %s179 = sadd.s32 %s178, 1
      %s180 = scalar_select %p177, %s178, %s179
      %p183 = pneg %p177
      %p184 = scmp.eq.s32.totalorder %s16, 1
      %p185 = por %p183, %p184
      %p186 = scmp.ne.s32.totalorder %s178, %s181
      %p187 = scmp.eq.s32.totalorder %s16, 0
      %p188 = por %p186, %p187
      %p189 = scmp.ne.s32.totalorder %s178, %s181
      %p190 = scmp.eq.s32.totalorder %s21, 1
      %p191 = por %p189, %p190
      %p192 = scmp.ne.s32.totalorder %s181, %s182
      %p193 = scmp.eq.s32.totalorder %s21, 0
      %p194 = por %p192, %p193
      %p195 = scmp.ne.s32.totalorder %s181, %s182
      %p196 = scmp.eq.s32.totalorder %s22, 1
      %p197 = por %p195, %p196
      %p199 = scmp.ne.s32.totalorder %s182, %s198
      %p200 = scmp.eq.s32.totalorder %s22, 0
      %p201 = por %p199, %p200
      %p202 = scmp.le.s32.totalorder 1, %s16
      %p203 = scmp.lt.s32.totalorder %s16, 3
      %p204 = pnand %p202, %p203
      %p205 = pneg %p204
      // Predicated region
      $region9: #{conv_stem_forward.1} parent=5 // pred_check
        _
      $region10: #{conv_stem_forward.1} parent=5 // pred_check_branch
        %207 = sbr.rel (%p204) target = $region12
      $region11: #{conv_stem_forward.1} parent=5 // pred_region
        %s208 = ssub.s32 %s16, 1
        // Predicated region
        $region13: #{conv_stem_forward.1} parent=11 // pred_check
          %p209 = pneg %p63
        $region14: #{conv_stem_forward.1} parent=11 // pred_check_branch
          %211 = sbr.rel (%p209) target = $region16
        $region15: #{conv_stem_forward.1} parent=11 // pred_region
          _
        $region16: #{conv_stem_forward.1} parent=11 // pred_fallthru
          _
        // Predicated region
        $region17: #{conv_stem_forward.1} parent=11 // pred_check
          %p212 = pneg %p84
        $region18: #{conv_stem_forward.1} parent=11 // pred_check_branch
          %214 = sbr.rel (%p212) target = $region20
        $region19: #{conv_stem_forward.1} parent=11 // pred_region
          _
        $region20: #{conv_stem_forward.1} parent=11 // pred_fallthru
          _
        // Predicated region
        $region21: #{conv_stem_forward.1} parent=11 // pred_check
          %p215 = pneg %p105
        $region22: #{conv_stem_forward.1} parent=11 // pred_check_branch
          %217 = sbr.rel (%p215) target = $region24
        $region23: #{conv_stem_forward.1} parent=11 // pred_region
          _
        $region24: #{conv_stem_forward.1} parent=11 // pred_fallthru
          _
        // Predicated region
        $region25: #{conv_stem_forward.1} parent=11 // pred_check
          %p218 = pneg %p126
        $region26: #{conv_stem_forward.1} parent=11 // pred_check_branch
          %220 = sbr.rel (%p218) target = $region28
        $region27: #{conv_stem_forward.1} parent=11 // pred_region
          _
        $region28: #{conv_stem_forward.1} parent=11 // pred_fallthru
          _
        // Predicated region
        $region29: #{conv_stem_forward.1} parent=11 // pred_check
          %p221 = pneg %p147
        $region30: #{conv_stem_forward.1} parent=11 // pred_check_branch
          %223 = sbr.rel (%p221) target = $region32
        $region31: #{conv_stem_forward.1} parent=11 // pred_region
          _
        $region32: #{conv_stem_forward.1} parent=11 // pred_fallthru
          _
        // Predicated region
        $region33: #{conv_stem_forward.1} parent=11 // pred_check
          %p224 = pneg %p168
        $region34: #{conv_stem_forward.1} parent=11 // pred_check_branch
          %226 = sbr.rel (%p224) target = $region36
        $region35: #{conv_stem_forward.1} parent=11 // pred_region
          _
        $region36: #{conv_stem_forward.1} parent=11 // pred_fallthru
          _
      $region12: #{conv_stem_forward.1} parent=5 // pred_fallthru
        _
      %p227 = scmp.lt.s32.totalorder %s16, 2
      // Predicated region
      $region37: #{conv_stem_forward.1} parent=5 // pred_check
        %p228 = pneg %p227
      $region38: #{conv_stem_forward.1} parent=5 // pred_check_branch
        %230 = sbr.rel (%p228) target = $region40
      $region39: #{conv_stem_forward.1} parent=5 // pred_region
        // Predicated region
        $region41: #{conv_stem_forward.1} parent=39 // pred_check
          %p231 = pneg %p36
        $region42: #{conv_stem_forward.1} parent=39 // pred_check_branch
          %233 = sbr.rel (%p231) target = $region44
        $region43: #{conv_stem_forward.1} parent=39 // pred_region
          %p234 = scmp.lt.s32.totalorder %s16, 1
          %s235 = scalar_select %p234, %s16, 1
          %s236 = smul.addr %s235, 8
          %s237 = smul.addr %s236, 4
          %s238 = scalar_lea.vmem %s0, %s237
        $region44: #{conv_stem_forward.1} parent=39 // pred_fallthru
          _
      $region40: #{conv_stem_forward.1} parent=5 // pred_fallthru
        _
      %p239 = scmp.le.s32.totalorder 1, %s16
      %p240 = scmp.lt.s32.totalorder %s16, 3
      %p241 = pnand %p239, %p240
      %p242 = pneg %p241
      // Predicated region
      $region45: #{conv_stem_forward.1} parent=5 // pred_check
        _
      $region46: #{conv_stem_forward.1} parent=5 // pred_check_branch
        %244 = sbr.rel (%p241) target = $region48
      $region47: #{conv_stem_forward.1} parent=5 // pred_region
        %s245 = ssub.s32 %s16, 1
        %p246 = scmp.lt.s32.totalorder %s21, 1
        %s247 = scalar_select %p246, %s21, 1
        %s248 = smul.addr %s247, 8
        %s249 = smul.addr %s248, 4
        %s250 = scalar_lea.vmem %s0, %s249
        %p251 = pneg %p42
        %p252 = pneg %p39
        %p253 = pneg %p63
        %p254 = pneg %p60
        %p255 = pneg %p84
        %p256 = pneg %p81
        %p257 = pneg %p105
        %p258 = pneg %p102
        %p259 = pneg %p126
        %p260 = pneg %p123
        %p261 = pneg %p147
        %p262 = pneg %p144
        %p263 = pneg %p168
        %p264 = pneg %p165
        %p265 = pneg %p194
        %p266 = pneg %p191
        %s267 = sand.u32 %s181, 1
        %s268 = scalar_lea.sflag [#allocation3], %s267
        %s269 = sand.u32 %s181, 1
        %s270 = smul.addr %s269, 8
        %s271 = scalar_lea.vmem [#allocation2], %s270
        %p272 = scmp.lt.s32.totalorder %s21, 1
        %s273 = scalar_select %p272, %s21, 1
        %s274 = smul.addr %s273, 8
        %s275 = smul.addr %s274, 4
        %s276 = scalar_lea.vmem %s0, %s275
        %v280 = vld [vmem:[%s276] sm:$0xf]
        %v281 = vld [vmem:[%s276 + $0x4] sm:$0xf]
        %v282 = vld [vmem:[%s1] sm:$0xf]
        %v283 = vld [vmem:[%s1 + $0x4] sm:$0xf]
        %v284 = vld [vmem:[%s1 + $0x8] sm:$0xf]
        %v285 = vld [vmem:[%s1 + $0xc] sm:$0xf]
        %v286 = vld [vmem:[%s2] sm:$0x1]
        %v288 = vlaneseq
        %v289 = vshrl.u32 %v288, 7
        %v290 = vsub.s32 0, %v289
        %v291 = vrot.slane %v286, %v290
        %v295 = vunpack.c.l.b16 %v280
        %v296 = vunpack.c.l.b16 %v281
        %v297 = vpack.c.b16 %v296, %v295
        %v302 = vunpack.c.l.b16 %v282
        %v303 = vunpack.c.l.b16 %v283
        %v304 = vunpack.c.l.b16 %v284
        %v305 = vunpack.c.l.b16 %v285
        %v306 = vpack.c.b16 %v303, %v302
        %v307 = vpack.c.b16 %v305, %v304
        %vm310 = vcmask 261120
        %v312 = vsel %vm310, %v297, 0
        %314 = vmatprep.subr.bf16.mxu0 0
        %315 = vmatpush1.bf16.msra.mxu0 %v306
        %316 = vmatprep.subr.bf16.mxu0 0
        %317 = vmatpush1.bf16.msra.mxu0 %v307
        %318 = vmatprep.subr.bf16.mxu0 0
        %319 = vmatpush1.bf16.msra.mxu0 0
        %320 = vmatprep.subr.bf16.mxu0 0
        %321 = vmatpush1.bf16.msra.mxu0 0
        %322 = vmatprep.subr.bf16.mxu0 0
        %323 = vmatpush1.bf16.msra.mxu0 0
        %324 = vmatprep.subr.bf16.mxu0 0
        %325 = vmatpush1.bf16.msra.mxu0 0
        %326 = vmatprep.subr.bf16.mxu0 0
        %327 = vmatpush1.bf16.msra.mxu0 0
        %328 = vmatprep.subr.bf16.mxu0 0
        %329 = vmatpush1.bf16.msra.mxu0 0
        %330 = vmatprep.subr.bf16.mxu0 0
        %331 = vmatpush1.bf16.msra.mxu0 0
        %332 = vmatprep.subr.bf16.mxu0 0
        %333 = vmatpush1.bf16.msra.mxu0 0
        %334 = vmatprep.subr.bf16.mxu0 0
        %335 = vmatpush1.bf16.msra.mxu0 0
        %336 = vmatprep.subr.bf16.mxu0 0
        %337 = vmatpush1.bf16.msra.mxu0 0
        %338 = vmatprep.subr.bf16.mxu0 0
        %339 = vmatpush1.bf16.msra.mxu0 0
        %340 = vmatprep.subr.bf16.mxu0 0
        %341 = vmatpush1.bf16.msra.mxu0 0
        %342 = vmatprep.subr.bf16.mxu0 0
        %343 = vmatpush1.bf16.msra.mxu0 0
        %344 = vmatprep.subr.bf16.mxu0 0
        %345 = vmatpush1.bf16.msra.mxu0 0
        %346 = vmatprep.mubr.bf16.mxu0 0
        %347 = vmatmul.mubr.bf16.gmra.mrb[0].mxu0 %v312
        %v348 = vpop.f32.mrb[0].mxu0
        %v349 = vadd.f32 %v291, %v348
        %v350 = vpop.f32.mrb[0].mxu0
        %v351 = vpop.f32.mrb[0].mxu0
        %v352 = vadd.f32 %v291, %v351
        %v353 = vpop.f32.mrb[0].mxu0
        %354 = vdwg.mxu0
        %v355 = vmax.f32 %v349, 0.0
        %v356 = vmax.f32 %v352, 0.0
        %v357 = vpack.c.bf16 %v356, %v355
        %s358 = scalar_lea.vmem %s276, 8
        %v359 = vld [vmem:[%s358] sm:$0xf]
        %v360 = vld [vmem:[%s358 + $0x4] sm:$0xf]
        %v363 = vunpack.c.l.b16 %v359
        %v364 = vunpack.c.l.b16 %v360
        %v365 = vpack.c.b16 %v364, %v363
        %v367 = vsel %vm310, %v365, 0
        %369 = vmatprep.subr.bf16.mxu0 0
        %370 = vmatpush1.bf16.msra.mxu0 %v306
        %371 = vmatprep.subr.bf16.mxu0 0
        %372 = vmatpush1.bf16.msra.mxu0 %v307
        %373 = vmatprep.subr.bf16.mxu0 0
        %374 = vmatpush1.bf16.msra.mxu0 0
        %375 = vmatprep.subr.bf16.mxu0 0
        %376 = vmatpush1.bf16.msra.mxu0 0
        %377 = vmatprep.subr.bf16.mxu0 0
        %378 = vmatpush1.bf16.msra.mxu0 0
        %379 = vmatprep.subr.bf16.mxu0 0
        %380 = vmatpush1.bf16.msra.mxu0 0
        %381 = vmatprep.subr.bf16.mxu0 0
        %382 = vmatpush1.bf16.msra.mxu0 0
        %383 = vmatprep.subr.bf16.mxu0 0
        %384 = vmatpush1.bf16.msra.mxu0 0
        %385 = vmatprep.subr.bf16.mxu0 0
        %386 = vmatpush1.bf16.msra.mxu0 0
        %387 = vmatprep.subr.bf16.mxu0 0
        %388 = vmatpush1.bf16.msra.mxu0 0
        %389 = vmatprep.subr.bf16.mxu0 0
        %390 = vmatpush1.bf16.msra.mxu0 0
        %391 = vmatprep.subr.bf16.mxu0 0
        %392 = vmatpush1.bf16.msra.mxu0 0
        %393 = vmatprep.subr.bf16.mxu0 0
        %394 = vmatpush1.bf16.msra.mxu0 0
        %395 = vmatprep.subr.bf16.mxu0 0
        %396 = vmatpush1.bf16.msra.mxu0 0
        %397 = vmatprep.subr.bf16.mxu0 0
        %398 = vmatpush1.bf16.msra.mxu0 0
        %399 = vmatprep.subr.bf16.mxu0 0
        %400 = vmatpush1.bf16.msra.mxu0 0
        %401 = vmatprep.mubr.bf16.mxu0 0
        %402 = vmatmul.mubr.bf16.gmra.mrb[0].mxu0 %v367
        %v403 = vpop.f32.mrb[0].mxu0
        %v404 = vadd.f32 %v291, %v403
        %v405 = vpop.f32.mrb[0].mxu0
        %v406 = vpop.f32.mrb[0].mxu0
        %v407 = vadd.f32 %v291, %v406
        %v408 = vpop.f32.mrb[0].mxu0
        %409 = vdwg.mxu0
        %v410 = vmax.f32 %v404, 0.0
        %v411 = vmax.f32 %v407, 0.0
        %v412 = vpack.c.bf16 %v411, %v410
        %s413 = scalar_lea.vmem %s276, 16
        %v414 = vld [vmem:[%s413] sm:$0xf]
        %v415 = vld [vmem:[%s413 + $0x4] sm:$0xf]
        %v418 = vunpack.c.l.b16 %v414
        %v419 = vunpack.c.l.b16 %v415
        %v420 = vpack.c.b16 %v419, %v418
        %v422 = vsel %vm310, %v420, 0
        %424 = vmatprep.subr.bf16.mxu0 0
        %425 = vmatpush1.bf16.msra.mxu0 %v306
        %426 = vmatprep.subr.bf16.mxu0 0
        %427 = vmatpush1.bf16.msra.mxu0 %v307
        %428 = vmatprep.subr.bf16.mxu0 0
        %429 = vmatpush1.bf16.msra.mxu0 0
        %430 = vmatprep.subr.bf16.mxu0 0
        %431 = vmatpush1.bf16.msra.mxu0 0
        %432 = vmatprep.subr.bf16.mxu0 0
        %433 = vmatpush1.bf16.msra.mxu0 0
        %434 = vmatprep.subr.bf16.mxu0 0
        %435 = vmatpush1.bf16.msra.mxu0 0
        %436 = vmatprep.subr.bf16.mxu0 0
        %437 = vmatpush1.bf16.msra.mxu0 0
        %438 = vmatprep.subr.bf16.mxu0 0
        %439 = vmatpush1.bf16.msra.mxu0 0
        %440 = vmatprep.subr.bf16.mxu0 0
        %441 = vmatpush1.bf16.msra.mxu0 0
        %442 = vmatprep.subr.bf16.mxu0 0
        %443 = vmatpush1.bf16.msra.mxu0 0
        %444 = vmatprep.subr.bf16.mxu0 0
        %445 = vmatpush1.bf16.msra.mxu0 0
        %446 = vmatprep.subr.bf16.mxu0 0
        %447 = vmatpush1.bf16.msra.mxu0 0
        %448 = vmatprep.subr.bf16.mxu0 0
        %449 = vmatpush1.bf16.msra.mxu0 0
        %450 = vmatprep.subr.bf16.mxu0 0
        %451 = vmatpush1.bf16.msra.mxu0 0
        %452 = vmatprep.subr.bf16.mxu0 0
        %453 = vmatpush1.bf16.msra.mxu0 0
        %454 = vmatprep.subr.bf16.mxu0 0
        %455 = vmatpush1.bf16.msra.mxu0 0
        %456 = vmatprep.mubr.bf16.mxu0 0
        %457 = vmatmul.mubr.bf16.gmra.mrb[0].mxu0 %v422
        %v458 = vpop.f32.mrb[0].mxu0
        %v459 = vadd.f32 %v291, %v458
        %v460 = vpop.f32.mrb[0].mxu0
        %v461 = vpop.f32.mrb[0].mxu0
        %v462 = vadd.f32 %v291, %v461
        %v463 = vpop.f32.mrb[0].mxu0
        %464 = vdwg.mxu0
        %v465 = vmax.f32 %v459, 0.0
        %v466 = vmax.f32 %v462, 0.0
        %v467 = vpack.c.bf16 %v466, %v465
        %s468 = scalar_lea.vmem %s276, 24
        %v469 = vld [vmem:[%s468] sm:$0xf]
        %v470 = vld [vmem:[%s468 + $0x4] sm:$0xf]
        %v473 = vunpack.c.l.b16 %v469
        %v474 = vunpack.c.l.b16 %v470
        %v475 = vpack.c.b16 %v474, %v473
        %v477 = vsel %vm310, %v475, 0
        %479 = vmatprep.subr.bf16.mxu0 0
        %480 = vmatpush1.bf16.msra.mxu0 %v306
        %481 = vmatprep.subr.bf16.mxu0 0
        %482 = vmatpush1.bf16.msra.mxu0 %v307
        %483 = vmatprep.subr.bf16.mxu0 0
        %484 = vmatpush1.bf16.msra.mxu0 0
        %485 = vmatprep.subr.bf16.mxu0 0
        %486 = vmatpush1.bf16.msra.mxu0 0
        %487 = vmatprep.subr.bf16.mxu0 0
        %488 = vmatpush1.bf16.msra.mxu0 0
        %489 = vmatprep.subr.bf16.mxu0 0
        %490 = vmatpush1.bf16.msra.mxu0 0
        %491 = vmatprep.subr.bf16.mxu0 0
        %492 = vmatpush1.bf16.msra.mxu0 0
        %493 = vmatprep.subr.bf16.mxu0 0
        %494 = vmatpush1.bf16.msra.mxu0 0
        %495 = vmatprep.subr.bf16.mxu0 0
        %496 = vmatpush1.bf16.msra.mxu0 0
        %497 = vmatprep.subr.bf16.mxu0 0
        %498 = vmatpush1.bf16.msra.mxu0 0
        %499 = vmatprep.subr.bf16.mxu0 0
        %500 = vmatpush1.bf16.msra.mxu0 0
        %501 = vmatprep.subr.bf16.mxu0 0
        %502 = vmatpush1.bf16.msra.mxu0 0
        %503 = vmatprep.subr.bf16.mxu0 0
        %504 = vmatpush1.bf16.msra.mxu0 0
        %505 = vmatprep.subr.bf16.mxu0 0
        %506 = vmatpush1.bf16.msra.mxu0 0
        %507 = vmatprep.subr.bf16.mxu0 0
        %508 = vmatpush1.bf16.msra.mxu0 0
        %509 = vmatprep.subr.bf16.mxu0 0
        %510 = vmatpush1.bf16.msra.mxu0 0
        %511 = vmatprep.mubr.bf16.mxu0 0
        %512 = vmatmul.mubr.bf16.gmra.mrb[0].mxu0 %v477
        %v513 = vpop.f32.mrb[0].mxu0
        %v514 = vadd.f32 %v291, %v513
        %v515 = vpop.f32.mrb[0].mxu0
        %v516 = vpop.f32.mrb[0].mxu0
        %v517 = vadd.f32 %v291, %v516
        %v518 = vpop.f32.mrb[0].mxu0
        %519 = vdwg.mxu0
        %v520 = vmax.f32 %v514, 0.0
        %v521 = vmax.f32 %v517, 0.0
        %v522 = vpack.c.bf16 %v521, %v520
        %v523 = vlaneseq
        %v524 = vshrl.u32 %v523, 7
        %v525 = vadd.s32 %v524, 8
        %vm526 = vcmp.lt.s32.totalorder %v524, 0
        %v527 = vsub.s32 0, %v524
        %v528 = vsel %vm526, %v527, %v524
        %v529 = vshrl.u32 %v528, 2
        %v530 = vand.u32 %v528, 3
        %v531 = vsub.s32 0, %v530
        %v532 = vsel %vm526, %v531, %v530
        %vm533 = vcmp.lt.s32.totalorder %v525, 0
        %v534 = vsub.s32 0, %v525
        %v535 = vsel %vm533, %v534, %v525
        %v536 = vshrl.u32 %v535, 2
        %v537 = vand.u32 %v535, 3
        %v538 = vsub.s32 0, %v537
        %v539 = vsel %vm533, %v538, %v537
        %vm540 = vcmp.ne.s32.totalorder %v532, 0
        %vm541 = vcmp.ne.s32.totalorder %v539, 0
        %vm542 = vcmp.lt.s32.totalorder %v532, 0
        %vm543 = vcmp.lt.s32.totalorder %v539, 0
        %vm544 = vmand %vm542, %vm540
        %vm545 = vmand %vm543, %vm541
        %v546 = vadd.s32 %v532, 4
        %v547 = vadd.s32 %v539, 4
        %v548 = vsel %vm544, %v546, %v532
        %v549 = vsel %vm545, %v547, %v539
        %vm550 = vcmp.eq.s32.totalorder %v548, 0
        %vm551 = vcmp.eq.s32.totalorder %v549, 0
        %v553 = vshrl.u32 %v522, 16
        %v555 = vrot.slane %v553, 5
        %v556 = vshll.u32 %v522, 16
        %v558 = vrot.slane %v556, 6
        %v559 = vor.u32 %v555, %v558
        %vm561 = vcmask 1042432
        %vm562 = vsmask.f32 2304
        %vm563 = vmand %vm561, %vm562
        %v564 = vsel %vm563, 0, %v559
        %vm565 = vmpackc.low %vm550, %vm550
        %vm566 = vmpackc.low %vm551, %vm551
        %v567 = vsel %vm565, 65537, 0
        %v568 = vsel %vm566, 65537, 0
        %v569 = vunpack.c.l.b16 %v567
        %v570 = vunpack.c.l.b16 %v568
        %v571 = vpack.c.b16 %v570, %v569
        %vm572 = vcmp.ne.s16.totalorder %v571, 0
        %v573 = vsel %vm572, 0, %v564
        %v574 = vld [vmem:[%s3] sm:$0x3]
        %v576 = vrot.slane %v467, 6
        %vm577 = vcmask 1041408
        %v580 = vsel %vm577, 0, %v576
        %s581 = scalar_lea.vmem %s3, 2
        %v582 = vld [vmem:[%s581] sm:$0x3]
        %vm583 = vcmask 31744
        %v584 = vsel %vm583, %v580, 0
        %v587 = vsel %vm577, %v582, 0
        %589 = vmatprep.subr.bf16.mxu0 0
        %590 = vmatpush1.bf16.msra.mxu0 %v587
        %591 = vmatprep.subr.bf16.mxu0 0
        %592 = vmatpush1.bf16.msra.mxu0 0
        %593 = vmatprep.subr.bf16.mxu0 0
        %594 = vmatpush1.bf16.msra.mxu0 0
        %595 = vmatprep.subr.bf16.mxu0 0
        %596 = vmatpush1.bf16.msra.mxu0 0
        %597 = vmatprep.subr.bf16.mxu0 0
        %598 = vmatpush1.bf16.msra.mxu0 0
        %599 = vmatprep.subr.bf16.mxu0 0
        %600 = vmatpush1.bf16.msra.mxu0 0
        %601 = vmatprep.subr.bf16.mxu0 0
        %602 = vmatpush1.bf16.msra.mxu0 0
        %603 = vmatprep.subr.bf16.mxu0 0
        %604 = vmatpush1.bf16.msra.mxu0 0
        %605 = vmatprep.subr.bf16.mxu0 0
        %606 = vmatpush1.bf16.msra.mxu0 0
        %607 = vmatprep.subr.bf16.mxu0 0
        %608 = vmatpush1.bf16.msra.mxu0 0
        %609 = vmatprep.subr.bf16.mxu0 0
        %610 = vmatpush1.bf16.msra.mxu0 0
        %611 = vmatprep.subr.bf16.mxu0 0
        %612 = vmatpush1.bf16.msra.mxu0 0
        %613 = vmatprep.subr.bf16.mxu0 0
        %614 = vmatpush1.bf16.msra.mxu0 0
        %615 = vmatprep.subr.bf16.mxu0 0
        %616 = vmatpush1.bf16.msra.mxu0 0
        %617 = vmatprep.subr.bf16.mxu0 0
        %618 = vmatpush1.bf16.msra.mxu0 0
        %619 = vmatprep.subr.bf16.mxu0 0
        %620 = vmatpush1.bf16.msra.mxu0 0
        %621 = vmatprep.mubr.bf16.mxu0 0
        %622 = vmatmul.mubr.bf16.gmra.mrb[0].mxu0 %v584
        %v623 = vpop.f32.mrb[0].mxu0
        %v624 = vadd.f32 0.0, %v623
        %v625 = vpop.f32.mrb[0].mxu0
        %v626 = vpop.f32.mrb[0].mxu0
        %v627 = vadd.f32 0.0, %v626
        %v628 = vpop.f32.mrb[0].mxu0
        %629 = vdwg.mxu0
        %v631 = vsel %vm583, %v573, 0
        %v634 = vsel %vm577, %v574, 0
        %636 = vmatprep.subr.bf16.mxu0 0
        %637 = vmatpush1.bf16.msra.mxu0 %v634
        %638 = vmatprep.subr.bf16.mxu0 0
        %639 = vmatpush1.bf16.msra.mxu0 0
        %640 = vmatprep.subr.bf16.mxu0 0
        %641 = vmatpush1.bf16.msra.mxu0 0
        %642 = vmatprep.subr.bf16.mxu0 0
        %643 = vmatpush1.bf16.msra.mxu0 0
        %644 = vmatprep.subr.bf16.mxu0 0
        %645 = vmatpush1.bf16.msra.mxu0 0
        %646 = vmatprep.subr.bf16.mxu0 0
        %647 = vmatpush1.bf16.msra.mxu0 0
        %648 = vmatprep.subr.bf16.mxu0 0
        %649 = vmatpush1.bf16.msra.mxu0 0
        %650 = vmatprep.subr.bf16.mxu0 0
        %651 = vmatpush1.bf16.msra.mxu0 0
        %652 = vmatprep.subr.bf16.mxu0 0
        %653 = vmatpush1.bf16.msra.mxu0 0
        %654 = vmatprep.subr.bf16.mxu0 0
        %655 = vmatpush1.bf16.msra.mxu0 0
        %656 = vmatprep.subr.bf16.mxu0 0
        %657 = vmatpush1.bf16.msra.mxu0 0
        %658 = vmatprep.subr.bf16.mxu0 0
        %659 = vmatpush1.bf16.msra.mxu0 0
        %660 = vmatprep.subr.bf16.mxu0 0
        %661 = vmatpush1.bf16.msra.mxu0 0
        %662 = vmatprep.subr.bf16.mxu0 0
        %663 = vmatpush1.bf16.msra.mxu0 0
        %664 = vmatprep.subr.bf16.mxu0 0
        %665 = vmatpush1.bf16.msra.mxu0 0
        %666 = vmatprep.subr.bf16.mxu0 0
        %667 = vmatpush1.bf16.msra.mxu0 0
        %668 = vmatprep.mubr.bf16.mxu0 0
        %669 = vmatmul.mubr.bf16.gmra.mrb[0].mxu0 %v631
        %v670 = vpop.f32.mrb[0].mxu0
        %v671 = vadd.f32 %v624, %v670
        %v672 = vpop.f32.mrb[0].mxu0
        %v673 = vpop.f32.mrb[0].mxu0
        %v674 = vadd.f32 %v627, %v673
        %v675 = vpop.f32.mrb[0].mxu0
        %676 = vdwg.mxu0
        %v678 = vrot.slane %v522, 6
        %v680 = vsel %vm577, 0, %v678
        %s681 = scalar_lea.vmem %s3, 4
        %v682 = vld [vmem:[%s681] sm:$0x3]
        %v683 = vsel %vm583, %v680, 0
        %v686 = vsel %vm577, %v682, 0
        %688 = vmatprep.subr.bf16.mxu0 0
        %689 = vmatpush1.bf16.msra.mxu0 %v686
        %690 = vmatprep.subr.bf16.mxu0 0
        %691 = vmatpush1.bf16.msra.mxu0 0
        %692 = vmatprep.subr.bf16.mxu0 0
        %693 = vmatpush1.bf16.msra.mxu0 0
        %694 = vmatprep.subr.bf16.mxu0 0
        %695 = vmatpush1.bf16.msra.mxu0 0
        %696 = vmatprep.subr.bf16.mxu0 0
        %697 = vmatpush1.bf16.msra.mxu0 0
        %698 = vmatprep.subr.bf16.mxu0 0
        %699 = vmatpush1.bf16.msra.mxu0 0
        %700 = vmatprep.subr.bf16.mxu0 0
        %701 = vmatpush1.bf16.msra.mxu0 0
        %702 = vmatprep.subr.bf16.mxu0 0
        %703 = vmatpush1.bf16.msra.mxu0 0
        %704 = vmatprep.subr.bf16.mxu0 0
        %705 = vmatpush1.bf16.msra.mxu0 0
        %706 = vmatprep.subr.bf16.mxu0 0
        %707 = vmatpush1.bf16.msra.mxu0 0
        %708 = vmatprep.subr.bf16.mxu0 0
        %709 = vmatpush1.bf16.msra.mxu0 0
        %710 = vmatprep.subr.bf16.mxu0 0
        %711 = vmatpush1.bf16.msra.mxu0 0
        %712 = vmatprep.subr.bf16.mxu0 0
        %713 = vmatpush1.bf16.msra.mxu0 0
        %714 = vmatprep.subr.bf16.mxu0 0
        %715 = vmatpush1.bf16.msra.mxu0 0
        %716 = vmatprep.subr.bf16.mxu0 0
        %717 = vmatpush1.bf16.msra.mxu0 0
        %718 = vmatprep.subr.bf16.mxu0 0
        %719 = vmatpush1.bf16.msra.mxu0 0
        %720 = vmatprep.mubr.bf16.mxu0 0
        %721 = vmatmul.mubr.bf16.gmra.mrb[0].mxu0 %v683
        %v722 = vpop.f32.mrb[0].mxu0
        %v723 = vadd.f32 0.0, %v722
        %v724 = vpop.f32.mrb[0].mxu0
        %v725 = vpop.f32.mrb[0].mxu0
        %v726 = vadd.f32 0.0, %v725
        %v727 = vpop.f32.mrb[0].mxu0
        %728 = vdwg.mxu0
        %v729 = vadd.f32 %v671, %v723
        %v730 = vadd.f32 %v674, %v726
        %v732 = vshrl.u32 %v412, 16
        %v734 = vrot.slane %v732, 7
        %v735 = vshll.u32 %v412, 16
        %v737 = vor.u32 %v734, %v735
        %vm739 = vcmask 1040384
        %vm740 = vsmask.f32 256
        %vm741 = vmand %vm739, %vm740
        %v742 = vsel %vm741, 0, %v737
        %v743 = vsel %vm572, 0, %v742
        %s744 = scalar_lea.vmem %s3, 6
        %v745 = vld [vmem:[%s744] sm:$0x3]
        %v747 = vsel %vm583, %v743, 0
        %v750 = vsel %vm577, %v745, 0
        %752 = vmatprep.subr.bf16.mxu0 0
        %753 = vmatpush1.bf16.msra.mxu0 %v750
        %754 = vmatprep.subr.bf16.mxu0 0
        %755 = vmatpush1.bf16.msra.mxu0 0
        %756 = vmatprep.subr.bf16.mxu0 0
        %757 = vmatpush1.bf16.msra.mxu0 0
        %758 = vmatprep.subr.bf16.mxu0 0
        %759 = vmatpush1.bf16.msra.mxu0 0
        %760 = vmatprep.subr.bf16.mxu0 0
        %761 = vmatpush1.bf16.msra.mxu0 0
        %762 = vmatprep.subr.bf16.mxu0 0
        %763 = vmatpush1.bf16.msra.mxu0 0
        %764 = vmatprep.subr.bf16.mxu0 0
        %765 = vmatpush1.bf16.msra.mxu0 0
        %766 = vmatprep.subr.bf16.mxu0 0
        %767 = vmatpush1.bf16.msra.mxu0 0
        %768 = vmatprep.subr.bf16.mxu0 0
        %769 = vmatpush1.bf16.msra.mxu0 0
        %770 = vmatprep.subr.bf16.mxu0 0
        %771 = vmatpush1.bf16.msra.mxu0 0
        %772 = vmatprep.subr.bf16.mxu0 0
        %773 = vmatpush1.bf16.msra.mxu0 0
        %774 = vmatprep.subr.bf16.mxu0 0
        %775 = vmatpush1.bf16.msra.mxu0 0
        %776 = vmatprep.subr.bf16.mxu0 0
        %777 = vmatpush1.bf16.msra.mxu0 0
        %778 = vmatprep.subr.bf16.mxu0 0
        %779 = vmatpush1.bf16.msra.mxu0 0
        %780 = vmatprep.subr.bf16.mxu0 0
        %781 = vmatpush1.bf16.msra.mxu0 0
        %782 = vmatprep.subr.bf16.mxu0 0
        %783 = vmatpush1.bf16.msra.mxu0 0
        %784 = vmatprep.mubr.bf16.mxu0 0
        %785 = vmatmul.mubr.bf16.gmra.mrb[0].mxu0 %v747
        %v786 = vpop.f32.mrb[0].mxu0
        %v787 = vadd.f32 0.0, %v786
        %v788 = vpop.f32.mrb[0].mxu0
        %v789 = vpop.f32.mrb[0].mxu0
        %v790 = vadd.f32 0.0, %v789
        %v791 = vpop.f32.mrb[0].mxu0
        %792 = vdwg.mxu0
        %v793 = vadd.f32 %v729, %v787
        %v794 = vadd.f32 %v730, %v790
        %s795 = scalar_lea.vmem %s3, 8
        %v796 = vld [vmem:[%s795] sm:$0x3]
        %v798 = vsel %vm583, %v357, 0
        %v801 = vsel %vm577, %v796, 0
        %803 = vmatprep.subr.bf16.mxu0 0
        %804 = vmatpush1.bf16.msra.mxu0 %v801
        %805 = vmatprep.subr.bf16.mxu0 0
        %806 = vmatpush1.bf16.msra.mxu0 0
        %807 = vmatprep.subr.bf16.mxu0 0
        %808 = vmatpush1.bf16.msra.mxu0 0
        %809 = vmatprep.subr.bf16.mxu0 0
        %810 = vmatpush1.bf16.msra.mxu0 0
        %811 = vmatprep.subr.bf16.mxu0 0
        %812 = vmatpush1.bf16.msra.mxu0 0
        %813 = vmatprep.subr.bf16.mxu0 0
        %814 = vmatpush1.bf16.msra.mxu0 0
        %815 = vmatprep.subr.bf16.mxu0 0
        %816 = vmatpush1.bf16.msra.mxu0 0
        %817 = vmatprep.subr.bf16.mxu0 0
        %818 = vmatpush1.bf16.msra.mxu0 0
        %819 = vmatprep.subr.bf16.mxu0 0
        %820 = vmatpush1.bf16.msra.mxu0 0
        %821 = vmatprep.subr.bf16.mxu0 0
        %822 = vmatpush1.bf16.msra.mxu0 0
        %823 = vmatprep.subr.bf16.mxu0 0
        %824 = vmatpush1.bf16.msra.mxu0 0
        %825 = vmatprep.subr.bf16.mxu0 0
        %826 = vmatpush1.bf16.msra.mxu0 0
        %827 = vmatprep.subr.bf16.mxu0 0
        %828 = vmatpush1.bf16.msra.mxu0 0
        %829 = vmatprep.subr.bf16.mxu0 0
        %830 = vmatpush1.bf16.msra.mxu0 0
        %831 = vmatprep.subr.bf16.mxu0 0
        %832 = vmatpush1.bf16.msra.mxu0 0
        %833 = vmatprep.subr.bf16.mxu0 0
        %834 = vmatpush1.bf16.msra.mxu0 0
        %835 = vmatprep.mubr.bf16.mxu0 0
        %836 = vmatmul.mubr.bf16.gmra.mrb[0].mxu0 %v798
        %v837 = vpop.f32.mrb[0].mxu0
        %v838 = vadd.f32 0.0, %v837
        %v839 = vpop.f32.mrb[0].mxu0
        %v840 = vpop.f32.mrb[0].mxu0
        %v841 = vadd.f32 0.0, %v840
        %v842 = vpop.f32.mrb[0].mxu0
        %843 = vdwg.mxu0
        %v844 = vadd.f32 %v793, %v838
        %v845 = vadd.f32 %v794, %v841
        %s846 = scalar_lea.vmem %s3, 10
        %v847 = vld [vmem:[%s846] sm:$0x3]
        %v848 = vsel %vm583, %v412, 0
        %v851 = vsel %vm577, %v847, 0
        %853 = vmatprep.subr.bf16.mxu0 0
        %854 = vmatpush1.bf16.msra.mxu0 %v851
        %855 = vmatprep.subr.bf16.mxu0 0
        %856 = vmatpush1.bf16.msra.mxu0 0
        %857 = vmatprep.subr.bf16.mxu0 0
        %858 = vmatpush1.bf16.msra.mxu0 0
        %859 = vmatprep.subr.bf16.mxu0 0
        %860 = vmatpush1.bf16.msra.mxu0 0
        %861 = vmatprep.subr.bf16.mxu0 0
        %862 = vmatpush1.bf16.msra.mxu0 0
        %863 = vmatprep.subr.bf16.mxu0 0
        %864 = vmatpush1.bf16.msra.mxu0 0
        %865 = vmatprep.subr.bf16.mxu0 0
        %866 = vmatpush1.bf16.msra.mxu0 0
        %867 = vmatprep.subr.bf16.mxu0 0
        %868 = vmatpush1.bf16.msra.mxu0 0
        %869 = vmatprep.subr.bf16.mxu0 0
        %870 = vmatpush1.bf16.msra.mxu0 0
        %871 = vmatprep.subr.bf16.mxu0 0
        %872 = vmatpush1.bf16.msra.mxu0 0
        %873 = vmatprep.subr.bf16.mxu0 0
        %874 = vmatpush1.bf16.msra.mxu0 0
        %875 = vmatprep.subr.bf16.mxu0 0
        %876 = vmatpush1.bf16.msra.mxu0 0
        %877 = vmatprep.subr.bf16.mxu0 0
        %878 = vmatpush1.bf16.msra.mxu0 0
        %879 = vmatprep.subr.bf16.mxu0 0
        %880 = vmatpush1.bf16.msra.mxu0 0
        %881 = vmatprep.subr.bf16.mxu0 0
        %882 = vmatpush1.bf16.msra.mxu0 0
        %883 = vmatprep.subr.bf16.mxu0 0
        %884 = vmatpush1.bf16.msra.mxu0 0
        %885 = vmatprep.mubr.bf16.mxu0 0
        %886 = vmatmul.mubr.bf16.gmra.mrb[0].mxu0 %v848
        %v887 = vpop.f32.mrb[0].mxu0
        %v888 = vadd.f32 0.0, %v887
        %v889 = vpop.f32.mrb[0].mxu0
        %v890 = vpop.f32.mrb[0].mxu0
        %v891 = vadd.f32 0.0, %v890
        %v892 = vpop.f32.mrb[0].mxu0
        %893 = vdwg.mxu0
        %v894 = vadd.f32 %v844, %v888
        %v895 = vadd.f32 %v845, %v891
        %v896 = vrot.slane %v553, 7
        %v897 = vor.u32 %v896, %v556
        %v899 = vsel %vm741, 0, %v897
        %v900 = vsel %vm572, 0, %v899
        %s901 = scalar_lea.vmem %s3, 12
        %v902 = vld [vmem:[%s901] sm:$0x3]
        %v904 = vsel %vm583, %v900, 0
        %v907 = vsel %vm577, %v902, 0
        %909 = vmatprep.subr.bf16.mxu0 0
        %910 = vmatpush1.bf16.msra.mxu0 %v907
        %911 = vmatprep.subr.bf16.mxu0 0
        %912 = vmatpush1.bf16.msra.mxu0 0
        %913 = vmatprep.subr.bf16.mxu0 0
        %914 = vmatpush1.bf16.msra.mxu0 0
        %915 = vmatprep.subr.bf16.mxu0 0
        %916 = vmatpush1.bf16.msra.mxu0 0
        %917 = vmatprep.subr.bf16.mxu0 0
        %918 = vmatpush1.bf16.msra.mxu0 0
        %919 = vmatprep.subr.bf16.mxu0 0
        %920 = vmatpush1.bf16.msra.mxu0 0
        %921 = vmatprep.subr.bf16.mxu0 0
        %922 = vmatpush1.bf16.msra.mxu0 0
        %923 = vmatprep.subr.bf16.mxu0 0
        %924 = vmatpush1.bf16.msra.mxu0 0
        %925 = vmatprep.subr.bf16.mxu0 0
        %926 = vmatpush1.bf16.msra.mxu0 0
        %927 = vmatprep.subr.bf16.mxu0 0
        %928 = vmatpush1.bf16.msra.mxu0 0
        %929 = vmatprep.subr.bf16.mxu0 0
        %930 = vmatpush1.bf16.msra.mxu0 0
        %931 = vmatprep.subr.bf16.mxu0 0
        %932 = vmatpush1.bf16.msra.mxu0 0
        %933 = vmatprep.subr.bf16.mxu0 0
        %934 = vmatpush1.bf16.msra.mxu0 0
        %935 = vmatprep.subr.bf16.mxu0 0
        %936 = vmatpush1.bf16.msra.mxu0 0
        %937 = vmatprep.subr.bf16.mxu0 0
        %938 = vmatpush1.bf16.msra.mxu0 0
        %939 = vmatprep.subr.bf16.mxu0 0
        %940 = vmatpush1.bf16.msra.mxu0 0
        %941 = vmatprep.mubr.bf16.mxu0 0
        %942 = vmatmul.mubr.bf16.gmra.mrb[0].mxu0 %v904
        %v943 = vpop.f32.mrb[0].mxu0
        %v944 = vadd.f32 0.0, %v943
        %v945 = vpop.f32.mrb[0].mxu0
        %v946 = vpop.f32.mrb[0].mxu0
        %v947 = vadd.f32 0.0, %v946
        %v948 = vpop.f32.mrb[0].mxu0
        %949 = vdwg.mxu0
        %v950 = vadd.f32 %v894, %v944
        %v951 = vadd.f32 %v895, %v947
        %s952 = scalar_lea.vmem %s3, 14
        %v953 = vld [vmem:[%s952] sm:$0x3]
        %v955 = vsel %vm583, %v467, 0
        %v958 = vsel %vm577, %v953, 0
        %960 = vmatprep.subr.bf16.mxu0 0
        %961 = vmatpush1.bf16.msra.mxu0 %v958
        %962 = vmatprep.subr.bf16.mxu0 0
        %963 = vmatpush1.bf16.msra.mxu0 0
        %964 = vmatprep.subr.bf16.mxu0 0
        %965 = vmatpush1.bf16.msra.mxu0 0
        %966 = vmatprep.subr.bf16.mxu0 0
        %967 = vmatpush1.bf16.msra.mxu0 0
        %968 = vmatprep.subr.bf16.mxu0 0
        %969 = vmatpush1.bf16.msra.mxu0 0
        %970 = vmatprep.subr.bf16.mxu0 0
        %971 = vmatpush1.bf16.msra.mxu0 0
        %972 = vmatprep.subr.bf16.mxu0 0
        %973 = vmatpush1.bf16.msra.mxu0 0
        %974 = vmatprep.subr.bf16.mxu0 0
        %975 = vmatpush1.bf16.msra.mxu0 0
        %976 = vmatprep.subr.bf16.mxu0 0
        %977 = vmatpush1.bf16.msra.mxu0 0
        %978 = vmatprep.subr.bf16.mxu0 0
        %979 = vmatpush1.bf16.msra.mxu0 0
        %980 = vmatprep.subr.bf16.mxu0 0
        %981 = vmatpush1.bf16.msra.mxu0 0
        %982 = vmatprep.subr.bf16.mxu0 0
        %983 = vmatpush1.bf16.msra.mxu0 0
        %984 = vmatprep.subr.bf16.mxu0 0
        %985 = vmatpush1.bf16.msra.mxu0 0
        %986 = vmatprep.subr.bf16.mxu0 0
        %987 = vmatpush1.bf16.msra.mxu0 0
        %988 = vmatprep.subr.bf16.mxu0 0
        %989 = vmatpush1.bf16.msra.mxu0 0
        %990 = vmatprep.subr.bf16.mxu0 0
        %991 = vmatpush1.bf16.msra.mxu0 0
        %992 = vmatprep.mubr.bf16.mxu0 0
        %993 = vmatmul.mubr.bf16.gmra.mrb[0].mxu0 %v955
        %v994 = vpop.f32.mrb[0].mxu0
        %v995 = vadd.f32 0.0, %v994
        %v996 = vpop.f32.mrb[0].mxu0
        %v997 = vpop.f32.mrb[0].mxu0
        %v998 = vadd.f32 0.0, %v997
        %v999 = vpop.f32.mrb[0].mxu0
        %1000 = vdwg.mxu0
        %v1001 = vadd.f32 %v950, %v995
        %v1002 = vadd.f32 %v951, %v998
        %s1003 = scalar_lea.vmem %s3, 16
        %v1004 = vld [vmem:[%s1003] sm:$0x3]
        %v1005 = vsel %vm583, %v522, 0
        %v1008 = vsel %vm577, %v1004, 0
        %1010 = vmatprep.subr.bf16.mxu0 0
        %1011 = vmatpush1.bf16.msra.mxu0 %v1008
        %1012 = vmatprep.subr.bf16.mxu0 0
        %1013 = vmatpush1.bf16.msra.mxu0 0
        %1014 = vmatprep.subr.bf16.mxu0 0
        %1015 = vmatpush1.bf16.msra.mxu0 0
        %1016 = vmatprep.subr.bf16.mxu0 0
        %1017 = vmatpush1.bf16.msra.mxu0 0
        %1018 = vmatprep.subr.bf16.mxu0 0
        %1019 = vmatpush1.bf16.msra.mxu0 0
        %1020 = vmatprep.subr.bf16.mxu0 0
        %1021 = vmatpush1.bf16.msra.mxu0 0
        %1022 = vmatprep.subr.bf16.mxu0 0
        %1023 = vmatpush1.bf16.msra.mxu0 0
        %1024 = vmatprep.subr.bf16.mxu0 0
        %1025 = vmatpush1.bf16.msra.mxu0 0
        %1026 = vmatprep.subr.bf16.mxu0 0
        %1027 = vmatpush1.bf16.msra.mxu0 0
        %1028 = vmatprep.subr.bf16.mxu0 0
        %1029 = vmatpush1.bf16.msra.mxu0 0
        %1030 = vmatprep.subr.bf16.mxu0 0
        %1031 = vmatpush1.bf16.msra.mxu0 0
        %1032 = vmatprep.subr.bf16.mxu0 0
        %1033 = vmatpush1.bf16.msra.mxu0 0
        %1034 = vmatprep.subr.bf16.mxu0 0
        %1035 = vmatpush1.bf16.msra.mxu0 0
        %1036 = vmatprep.subr.bf16.mxu0 0
        %1037 = vmatpush1.bf16.msra.mxu0 0
        %1038 = vmatprep.subr.bf16.mxu0 0
        %1039 = vmatpush1.bf16.msra.mxu0 0
        %1040 = vmatprep.subr.bf16.mxu0 0
        %1041 = vmatpush1.bf16.msra.mxu0 0
        %1042 = vmatprep.mubr.bf16.mxu0 0
        %1043 = vmatmul.mubr.bf16.gmra.mrb[0].mxu0 %v1005
        %v1044 = vpop.f32.mrb[0].mxu0
        %v1045 = vadd.f32 0.0, %v1044
        %v1046 = vpop.f32.mrb[0].mxu0
        %v1047 = vpop.f32.mrb[0].mxu0
        %v1048 = vadd.f32 0.0, %v1047
        %v1049 = vpop.f32.mrb[0].mxu0
        %1050 = vdwg.mxu0
        %v1051 = vadd.f32 %v1001, %v1045
        %v1052 = vadd.f32 %v1002, %v1048
        %v1053 = vld [vmem:[%s4] sm:$0x1]
        %v1055 = vlaneseq
        %v1056 = vshrl.u32 %v1055, 7
        %v1057 = vsub.s32 0, %v1056
        %v1058 = vrot.slane %v1053, %v1057
        %v1060 = vadd.f32 %v1051, %v1058
        %v1061 = vadd.f32 %v1052, %v1058
        %v1062 = vmax.f32 %v1060, 0.0
        %v1063 = vmax.f32 %v1061, 0.0
        %v1064 = vpack.c.bf16 %v1063, %v1062
        %v1065 = vld [vmem:[%s5] sm:$0xf]
        %v1066 = vld [vmem:[%s6] sm:$0x1]
        %v1068 = vlaneseq
        %v1069 = vshrl.u32 %v1068, 7
        %v1070 = vsub.s32 0, %v1069
        %v1071 = vrot.slane %v1066, %v1070
        %vm1073 = vcmask 64512
        %v1075 = vsel %vm1073, %v1064, 0
        %vm1077 = vcmask 1043456
        %v1079 = vsel %vm1077, %v1065, 0
        %1081 = vmatprep.subr.bf16.mxu0 0
        %1082 = vmatpush1.bf16.msra.mxu0 %v1079
        %1083 = vmatprep.subr.bf16.mxu0 0
        %1084 = vmatpush1.bf16.msra.mxu0 0
        %1085 = vmatprep.subr.bf16.mxu0 0
        %1086 = vmatpush1.bf16.msra.mxu0 0
        %1087 = vmatprep.subr.bf16.mxu0 0
        %1088 = vmatpush1.bf16.msra.mxu0 0
        %1089 = vmatprep.subr.bf16.mxu0 0
        %1090 = vmatpush1.bf16.msra.mxu0 0
        %1091 = vmatprep.subr.bf16.mxu0 0
        %1092 = vmatpush1.bf16.msra.mxu0 0
        %1093 = vmatprep.subr.bf16.mxu0 0
        %1094 = vmatpush1.bf16.msra.mxu0 0
        %1095 = vmatprep.subr.bf16.mxu0 0
        %1096 = vmatpush1.bf16.msra.mxu0 0
        %1097 = vmatprep.subr.bf16.mxu0 0
        %1098 = vmatpush1.bf16.msra.mxu0 0
        %1099 = vmatprep.subr.bf16.mxu0 0
        %1100 = vmatpush1.bf16.msra.mxu0 0
        %1101 = vmatprep.subr.bf16.mxu0 0
        %1102 = vmatpush1.bf16.msra.mxu0 0
        %1103 = vmatprep.subr.bf16.mxu0 0
        %1104 = vmatpush1.bf16.msra.mxu0 0
        %1105 = vmatprep.subr.bf16.mxu0 0
        %1106 = vmatpush1.bf16.msra.mxu0 0
        %1107 = vmatprep.subr.bf16.mxu0 0
        %1108 = vmatpush1.bf16.msra.mxu0 0
        %1109 = vmatprep.subr.bf16.mxu0 0
        %1110 = vmatpush1.bf16.msra.mxu0 0
        %1111 = vmatprep.subr.bf16.mxu0 0
        %1112 = vmatpush1.bf16.msra.mxu0 0
        %1113 = vmatprep.mubr.bf16.mxu0 0
        %1114 = vmatmul.mubr.bf16.gmra.mrb[0].mxu0 %v1075
        %v1115 = vpop.f32.mrb[0].mxu0
        %v1116 = vadd.f32 %v1071, %v1115
        %v1117 = vpop.f32.mrb[0].mxu0
        %v1118 = vpop.f32.mrb[0].mxu0
        %v1119 = vadd.f32 %v1071, %v1118
        %v1120 = vpop.f32.mrb[0].mxu0
        %1121 = vdwg.mxu0
        %v1122 = vpack.c.bf16 %v1119, %v1116
        %v1124 = vunpack.c.l.b16 %v1122
        %v1125 = vunpack.c.h.b16 %v1122
        %v1126 = vpack.c.b16 %v1124, %v1124
        %v1127 = vpack.c.b16 %v1125, %v1125
        %vm1130 = vcmask 257024
        %1131 = vst.msk [vmem:[%s271] sm:$0xf] %vm1130, %v1126
        %1132 = vst.msk [vmem:[%s271 + $0x4] sm:$0xf] %vm1130, %v1127
        %s1133 = sand.u32 %s181, 1
        %s1134 = scalar_lea.sflag [#allocation3], %s1133
        %s1135 = sand.u32 %s181, 1
        %s1136 = smul.addr %s1135, 8
        %s1137 = scalar_lea.vmem [#allocation2], %s1136
        // Predicated region
        $region49: #{conv_stem_forward.1} parent=47 // pred_check
          %p1138 = pneg %p191
        $region50: #{conv_stem_forward.1} parent=47 // pred_check_branch
          %1140 = sbr.rel (%p1138) target = $region52
        $region51: #{conv_stem_forward.1} parent=47 // pred_region
          %s1142 = ssub.s32 128, 128
          %1143 = vsyncadd %s1134, %s1142
          %s1144 = smul.addr %s21, 2
          %s1145 = smul.addr %s1144, 64
          %s1146 = scalar_lea.hbm %s7, %s1145
          %s1147 = sshll.u32 %s1137, 4
          %s1148 = int_to_ptr.vmem [resolvable:$true] %s1147
          %1153 = dma.vmem_to_hbm [thread:$0]  %s1148, 128, %s1146, %s1134, 64, 64, 4
        $region52: #{conv_stem_forward.1} parent=47 // pred_fallthru
          _
      $region48: #{conv_stem_forward.1} parent=5 // pred_fallthru
        _
      %p1154 = scmp.le.s32.totalorder 2, %s16
      // Predicated region
      $region53: #{conv_stem_forward.1} parent=5 // pred_check
        %p1155 = pneg %p1154
      $region54: #{conv_stem_forward.1} parent=5 // pred_check_branch
        %1157 = sbr.rel (%p1155) target = $region56
      $region55: #{conv_stem_forward.1} parent=5 // pred_region
        %s1158 = ssub.s32 %s16, 2
        // Predicated region
        $region57: #{conv_stem_forward.1} parent=55 // pred_check
          %p1159 = pneg %p197
        $region58: #{conv_stem_forward.1} parent=55 // pred_check_branch
          %1161 = sbr.rel (%p1159) target = $region60
        $region59: #{conv_stem_forward.1} parent=55 // pred_region
          %s1162 = sand.u32 %s182, 1
          %s1163 = scalar_lea.sflag [#allocation3], %s1162
          %s1164 = sand.u32 %s182, 1
          %s1165 = smul.addr %s1164, 8
          %s1166 = scalar_lea.vmem [#allocation2], %s1165
          %1167 = dma.done %s1163, 128
        $region60: #{conv_stem_forward.1} parent=55 // pred_fallthru
          _
      $region56: #{conv_stem_forward.1} parent=5 // pred_fallthru
        _
    $region6: #{conv_stem_forward.1} parent=1 // loop_footer
      %s20 = sadd.s32 1, %s16
    $region7: #{conv_stem_forward.1} parent=1 // loop_footer_branch
      %15 = sbr.rel target = $region3
    $region8: #{conv_stem_forward.1} parent=1 // loop_exit
      _
    %1168 = vsyncpa [#allocation3], 1
    %s1169 = scalar_lea.sflag [#allocation3], 1
    %1170 = vsyncpa %s1169, 1

</llo_original>
